<compile_context>
chip_gen: v7x
topology: tpu7x:2x2x1
jax: 0.10.0
libtpu: 0.0.40
codegen_flags: <defaults>
</compile_context>

<pallas_src>
import numpy as np
import jax
import jax.numpy as jnp
from jax import lax
from jax.experimental import pallas as pl
from jax.experimental.pallas import tpu as pltpu

# ---------------------------------------------------------------------------
# Hyper-parameters (match EfficientAudioClassifier.__init__)
# ---------------------------------------------------------------------------
NUM_CLASSES = 4
N_MELS = 16
HOP_LENGTH = 1024
FIXED_LENGTH = 15 * HOP_LENGTH            # -> time_dim = 16
SAMPLE_RATE = 16000                       # unused by forward
TIME_DIM = int(FIXED_LENGTH / HOP_LENGTH) + 1
BN_EPS = 1e-5

H0, W0 = N_MELS, TIME_DIM                 # 16 x 16
H1, W1 = H0 // 2, W0 // 2                 # 8 x 8   (after pool 1)
H2, W2 = H1 // 2, W1 // 2                 # 4 x 4   (after pool 2)
P0, P1, P2 = H0 * W0, H1 * W1, H2 * W2    # 256, 64, 16
C1, C2 = 16, 32
FLAT = C2 * P2                            # 512
FC_HID = 64
PAD_OUT = 128                             # lane-padded logits slab


# ---------------------------------------------------------------------------
# Structural matrices (pure numpy; constants of the architecture)
# ---------------------------------------------------------------------------
def neighbor_mats(H, W):
    """9 x (H*W, H*W) 0/1 matrices: tap k = kh*3+kw of a 3x3 conv, padding=1."""
    P = H * W
    mats = np.zeros((9, P, P), np.float32)
    for k in range(9):
        di, dj = k // 3 - 1, k % 3 - 1
        for i in range(H):
            for j in range(W):
                ii, jj = i + di, j + dj
                if 0 <= ii < H and 0 <= jj < W:
                    mats[k, i * W + j, ii * W + jj] = 1.0
    return mats


def pool_phase_mats(H, W):
    """4 x (H//2*W//2, H*W) 0/1 matrices selecting the 4 phases of 2x2 windows."""
    Ho, Wo = H // 2, W // 2
    mats = np.zeros((4, Ho * Wo, H * W), np.float32)
    for ph in range(4):
        a, b = ph // 2, ph % 2
        for i in range(Ho):
            for j in range(Wo):
                mats[ph, i * Wo + j, (2 * i + a) * W + (2 * j + b)] = 1.0
    return mats


def _pool_right_mat(H, W):
    """(H*W, 4*(H//2)*(W//2)): right-multiply pool gather, phases stacked in lanes."""
    m = pool_phase_mats(H, W)
    return np.concatenate([m[ph].T for ph in range(4)], axis=1)


R1_POOL_NP = _pool_right_mat(H0, W0)                                   # (256, 256)
R2_POOL_NP = _pool_right_mat(H1, W1)                                   # (64, 64)
MDWT_CAT_NP = np.concatenate(
    [neighbor_mats(H1, W1)[k].T for k in range(9)], axis=0)            # (576, 64)


def _diag_mask(batch):
    """(B*C2, FLAT) 0/1: 1 where row channel (r % C2) == lane target (f // P2)."""
    r = np.arange(batch * C2)[:, None]
    f = np.arange(FLAT)[None, :]
    return ((r % C2) == (f // P2)).astype(np.float32)


# ---------------------------------------------------------------------------
# Deterministic parameter init (shapes from the PyTorch module)
# ---------------------------------------------------------------------------
def init_params(key):
    ks = jax.random.split(key, 22)
    u = lambda k, shape, a: jax.random.uniform(k, shape, jnp.float32, -a, a)
    p = {}
    p["w1"] = u(ks[0], (C1, 1, 3, 3), 1.0 / np.sqrt(9.0))
    p["b1"] = u(ks[1], (C1,), 1.0 / np.sqrt(9.0))
    p["wdw"] = u(ks[2], (C1, 1, 3, 3), 1.0 / np.sqrt(9.0))
    p["bdw"] = u(ks[3], (C1,), 1.0 / np.sqrt(9.0))
    p["wpw"] = u(ks[4], (C2, C1, 1, 1), 1.0 / np.sqrt(C1))
    p["bpw"] = u(ks[5], (C2,), 1.0 / np.sqrt(C1))
    for i, (name, c) in enumerate([("bn1", C1), ("bndw", C1), ("bnpw", C2)]):
        p[name + "_g"] = jax.random.uniform(ks[6 + 4 * i], (c,), jnp.float32, 0.5, 1.5)
        p[name + "_b"] = 0.1 * jax.random.normal(ks[7 + 4 * i], (c,), jnp.float32)
        p[name + "_m"] = 0.1 * jax.random.normal(ks[8 + 4 * i], (c,), jnp.float32)
        p[name + "_v"] = jax.random.uniform(ks[9 + 4 * i], (c,), jnp.float32, 0.5, 1.5)
    p["fc1_w"] = u(ks[18], (FC_HID, FLAT), 1.0 / np.sqrt(FLAT))
    p["fc1_b"] = u(ks[19], (FC_HID,), 1.0 / np.sqrt(FLAT))
    p["fc2_w"] = u(ks[20], (NUM_CLASSES, FC_HID), 1.0 / np.sqrt(FC_HID))
    p["fc2_b"] = u(ks[21], (NUM_CLASSES,), 1.0 / np.sqrt(FC_HID))
    return p


# ---------------------------------------------------------------------------
# One-time parameter preparation (hoisted out of the per-call hot path)
# ---------------------------------------------------------------------------
def prepare_params(p, batch):
    f32, bf16 = jnp.float32, jnp.bfloat16
    eye = jnp.eye(batch, dtype=f32)

    def fold_bn(gamma, beta, mean, var, conv_bias):
        s = gamma / jnp.sqrt(var + BN_EPS)
        t = (conv_bias - mean) * s + beta
        return s, t

    s1, t1 = fold_bn(p["bn1_g"], p["bn1_b"], p["bn1_m"], p["bn1_v"], p["b1"])
    sdw, tdw = fold_bn(p["bndw_g"], p["bndw_b"], p["bndw_m"], p["bndw_v"], p["bdw"])
    spw, tpw = fold_bn(p["bnpw_g"], p["bnpw_b"], p["bnpw_m"], p["bnpw_v"], p["bpw"])

    # per-row (batch*channel) column vectors
    col = lambda v: jnp.tile(v.reshape(-1, 1), (batch, 1)).astype(f32)

    w1mat = p["w1"].reshape(C1, 9)                 # k = kh*3 + kw
    wdwmat = p["wdw"].reshape(C1, 9)
    wpwmat = p["wpw"].reshape(C2, C1)

    wfc2 = jnp.zeros((FC_HID, PAD_OUT), f32).at[:, :NUM_CLASSES].set(
        jnp.transpose(p["fc2_w"]))
    bfc2 = jnp.zeros((1, PAD_OUT), f32).at[:, :NUM_CLASSES].set(
        p["fc2_b"].reshape(1, NUM_CLASSES))

    return dict(
        bdw1=jnp.kron(eye, w1mat).astype(bf16),              # (B*C1, B*9)
        s1=col(s1), t1=col(t1),                              # (B*C1, 1)
        r1=jnp.asarray(R1_POOL_NP, bf16),                    # (P0, 4*P1)
        mdwt=jnp.asarray(MDWT_CAT_NP, bf16),                 # (9*P1, P1)
        wdws=jnp.tile(wdwmat, (batch, 1)).astype(f32),       # (B*C1, 9)
        sdw=col(sdw), tdw=col(tdw),                          # (B*C1, 1)
        bdpw=jnp.kron(eye, wpwmat).astype(bf16),             # (B*C2, B*C1)
        spw=col(spw), tpw=col(tpw),                          # (B*C2, 1)
        r2=jnp.asarray(R2_POOL_NP, bf16),                    # (P1, 4*P2)
        diag=jnp.asarray(_diag_mask(batch), bf16),           # (B*C2, FLAT)
        sel=jnp.kron(eye, jnp.ones((1, C2), f32)).astype(bf16),   # (B, B*C2)
        wfc1=jnp.transpose(p["fc1_w"]).astype(bf16),         # (FLAT, FC_HID)
        bfc1=p["fc1_b"].reshape(1, FC_HID).astype(f32),
        wfc2=wfc2.astype(bf16),                              # (FC_HID, PAD_OUT)
        bfc2=bfc2,                                           # (1, PAD_OUT)
    )


# ---------------------------------------------------------------------------
# Fused Pallas kernel: whole forward pass in VMEM
# ---------------------------------------------------------------------------
def _fused_forward_kernel(xsh_ref, bdw1_ref, s1_ref, t1_ref, r1_ref, mdwt_ref,
                          wdws_ref, sdw_ref, tdw_ref, bdpw_ref, spw_ref,
                          tpw_ref, r2_ref, diag_ref, sel_ref,
                          wfc1_ref, bfc1_ref, wfc2_ref, bfc2_ref, out_ref):
    f32, bf16 = jnp.float32, jnp.bfloat16

    # conv1 (1->16, 3x3, pad=1): blockdiag(W1) @ im2col; folded bn1 + relu
    h1 = jnp.dot(bdw1_ref[...], xsh_ref[...],
                 preferred_element_type=f32)                       # (B*C1, P0)
    h1 = jnp.maximum(h1 * s1_ref[...] + t1_ref[...], 0.0)

    # maxpool 2x2: one matmul vs the 4 stacked phase-selection mats, then max
    z1 = jnp.dot(h1.astype(bf16), r1_ref[...],
                 preferred_element_type=f32)                       # (B*C1, 4*P1)
    pool1 = jnp.maximum(jnp.maximum(z1[:, 0 * P1:1 * P1], z1[:, 1 * P1:2 * P1]),
                        jnp.maximum(z1[:, 2 * P1:3 * P1], z1[:, 3 * P1:4 * P1]))

    # depthwise 3x3 (groups=16): per-tap row scale, concat along K, 1 matmul
    lhs = jnp.concatenate([pool1 * wdws_ref[:, k:k + 1] for k in range(9)],
                          axis=1)                                  # (B*C1, 9*P1)
    h2 = jnp.dot(lhs.astype(bf16), mdwt_ref[...],
                 preferred_element_type=f32)                       # (B*C1, P1)
    h2 = jnp.maximum(h2 * sdw_ref[...] + tdw_ref[...], 0.0)        # bn_dw + relu

    # pointwise 1x1 (16->32): blockdiag(Wpw^T) @ h2; folded bn_pw + relu
    h3 = jnp.dot(bdpw_ref[...], h2.astype(bf16),
                 preferred_element_type=f32)                       # (B*C2, P1)
    h3 = jnp.maximum(h3 * spw_ref[...] + tpw_ref[...], 0.0)

    # maxpool 2x2
    z2 = jnp.dot(h3.astype(bf16), r2_ref[...],
                 preferred_element_type=f32)                       # (B*C2, 4*P2)
    q = jnp.maximum(jnp.maximum(z2[:, 0 * P2:1 * P2], z2[:, 1 * P2:2 * P2]),
                    jnp.maximum(z2[:, 2 * P2:3 * P2], z2[:, 3 * P2:4 * P2]))

    # C-major flatten: feats[b, c*P2 + p] = q[b*C2 + c, p]
    qt = jnp.concatenate([q.astype(bf16)] * C2, axis=1)            # (B*C2, FLAT)
    qsel = qt * diag_ref[...]                                      # mask wrong c
    feats = jnp.dot(sel_ref[...], qsel,
                    preferred_element_type=f32)                    # (B, FLAT)

    # fc1 + relu (dropout(p=0.5) is the identity in eval mode), then fc2
    hfc = jnp.maximum(
        jnp.dot(feats.astype(bf16), wfc1_ref[...],
                preferred_element_type=f32) + bfc1_ref[...], 0.0)  # (B, FC_HID)
    out_ref[...] = (jnp.dot(hfc.astype(bf16), wfc2_ref[...],
                            preferred_element_type=f32) + bfc2_ref[...])


def _full_spec(shape):
    nd = len(shape)
    return pl.BlockSpec(shape, lambda i, _nd=nd: (0,) * _nd)


# ---------------------------------------------------------------------------
# Forward wrapper (single pallas_call)
# ---------------------------------------------------------------------------
@jax.jit
def efficient_audio_classifier_forward(x, prep):
    B = x.shape[0]
    # im2col for conv1 (in_channels = 1): 9 shifted, zero-padded copies.
    xp = jnp.pad(x.astype(jnp.float32), ((0, 0), (1, 1), (1, 1)))
    cols = [xp[:, kh:kh + H0, kw:kw + W0].reshape(B, 1, P0)
            for kh in range(3) for kw in range(3)]
    xsh = jnp.concatenate(cols, axis=1).reshape(B * 9, P0).astype(jnp.bfloat16)

    inputs = (xsh, prep["bdw1"], prep["s1"], prep["t1"], prep["r1"],
              prep["mdwt"], prep["wdws"], prep["sdw"], prep["tdw"],
              prep["bdpw"], prep["spw"], prep["tpw"], prep["r2"],
              prep["diag"], prep["sel"],
              prep["wfc1"], prep["bfc1"], prep["wfc2"], prep["bfc2"])

    out = pl.pallas_call(
        _fused_forward_kernel,
        out_shape=jax.ShapeDtypeStruct((B, PAD_OUT), jnp.float32),
        grid=(1,),
        in_specs=[_full_spec(a.shape) for a in inputs],
        out_specs=_full_spec((B, PAD_OUT)),
        compiler_params=pltpu.CompilerParams(dimension_semantics=("arbitrary",)),
    )(*inputs)
    return out[:, :NUM_CLASSES]


# ---------------------------------------------------------------------------
# Pure-JAX reference (mirrors the PyTorch forward) for a correctness check
# ---------------------------------------------------------------------------
def reference_forward(x, p):
    def bn(y, g, b, m, v):
        return ((y - m[None, :, None, None])
                / jnp.sqrt(v + BN_EPS)[None, :, None, None]
                * g[None, :, None, None] + b[None, :, None, None])

    def conv(y, w, b, groups=1):
        pad_h, pad_w = w.shape[2] // 2, w.shape[3] // 2
        out = lax.conv_general_dilated(
            y, w, window_strides=(1, 1),
            padding=((pad_h, pad_h), (pad_w, pad_w)),
            dimension_numbers=("NCHW", "OIHW", "NCHW"),
            feature_group_count=groups)
        return out + b[None, :, None, None]

    def pool(y):
        Bn, Cn, Hh, Ww = y.shape
        return y.reshape(Bn, Cn, Hh // 2, 2, Ww // 2, 2).max(axis=(3, 5))

    y = x[:, None].astype(jnp.float32)
    y = pool(jax.nn.relu(bn(conv(y, p["w1"], p["b1"]),
                            p["bn1_g"], p["bn1_b"], p["bn1_m"], p["bn1_v"])))
    y = jax.nn.relu(bn(conv(y, p["wdw"], p["bdw"], groups=C1),
                       p["bndw_g"], p["bndw_b"], p["bndw_m"], p["bndw_v"]))
    y = pool(jax.nn.relu(bn(conv(y, p["wpw"], p["bpw"]),
                            p["bnpw_g"], p["bnpw_b"], p["bnpw_m"], p["bnpw_v"])))
    y = y.reshape(y.shape[0], -1)
    y = jax.nn.relu(y @ p["fc1_w"].T + p["fc1_b"])
    # dropout: identity in eval mode
    return y @ p["fc2_w"].T + p["fc2_b"]


if __name__ == "__main__":
    key = jax.random.PRNGKey(0)
    kx, kp = jax.random.split(key)
    B = 2
    x = jax.random.normal(kx, (B, N_MELS, TIME_DIM), jnp.float32)
    params = init_params(kp)
    prep = prepare_params(params, B)          # one-time, outside the hot path

    out = efficient_audio_classifier_forward(x, prep)
    out = jax.block_until_ready(out)
    assert out.shape == (B, NUM_CLASSES)

    ref = jax.block_until_ready(reference_forward(x, params))
    np.testing.assert_allclose(np.asarray(out), np.asarray(ref),
                               rtol=2e-2, atol=2e-2)
    print("KERNEL_OK")
</pallas_src>

<mosaic_0001>
module attributes {stable_mosaic.version = 11 : i64} {
  func.func @_fused_forward_kernel(%arg0: i32, %arg1: memref<18x256xbf16, #tpu.memory_space<vmem>>, %arg2: memref<32x18xbf16, #tpu.memory_space<vmem>>, %arg3: memref<32x1xf32, #tpu.memory_space<vmem>>, %arg4: memref<32x1xf32, #tpu.memory_space<vmem>>, %arg5: memref<256x256xbf16, #tpu.memory_space<vmem>>, %arg6: memref<576x64xbf16, #tpu.memory_space<vmem>>, %arg7: memref<32x9xf32, #tpu.memory_space<vmem>>, %arg8: memref<32x1xf32, #tpu.memory_space<vmem>>, %arg9: memref<32x1xf32, #tpu.memory_space<vmem>>, %arg10: memref<64x32xbf16, #tpu.memory_space<vmem>>, %arg11: memref<64x1xf32, #tpu.memory_space<vmem>>, %arg12: memref<64x1xf32, #tpu.memory_space<vmem>>, %arg13: memref<64x64xbf16, #tpu.memory_space<vmem>>, %arg14: memref<64x512xbf16, #tpu.memory_space<vmem>>, %arg15: memref<2x64xbf16, #tpu.memory_space<vmem>>, %arg16: memref<512x64xbf16, #tpu.memory_space<vmem>>, %arg17: memref<1x64xf32, #tpu.memory_space<vmem>>, %arg18: memref<64x128xbf16, #tpu.memory_space<vmem>>, %arg19: memref<1x128xf32, #tpu.memory_space<vmem>>, %arg20: memref<2x128xf32, #tpu.memory_space<vmem>>) attributes {dimension_semantics = [#tpu.dimension_semantics<arbitrary>], iteration_bounds = array<i64: 1>, scalar_prefetch = 0 : i64, scratch_operands = 0 : i64, tpu.core_type = #tpu.core_type<tc>, window_params = [{pipeline_mode = #tpu.pipeline_mode<synchronous>, transform_indices = @transform_0, window_bounds = array<i64: 18, 256>}, {pipeline_mode = #tpu.pipeline_mode<synchronous>, transform_indices = @transform_1, window_bounds = array<i64: 32, 18>}, {pipeline_mode = #tpu.pipeline_mode<synchronous>, transform_indices = @transform_2, window_bounds = array<i64: 32, 1>}, {pipeline_mode = #tpu.pipeline_mode<synchronous>, transform_indices = @transform_3, window_bounds = array<i64: 32, 1>}, {pipeline_mode = #tpu.pipeline_mode<synchronous>, transform_indices = @transform_4, window_bounds = array<i64: 256, 256>}, {pipeline_mode = #tpu.pipeline_mode<synchronous>, transform_indices = @transform_5, window_bounds = array<i64: 576, 64>}, {pipeline_mode = #tpu.pipeline_mode<synchronous>, transform_indices = @transform_6, window_bounds = array<i64: 32, 9>}, {pipeline_mode = #tpu.pipeline_mode<synchronous>, transform_indices = @transform_7, window_bounds = array<i64: 32, 1>}, {pipeline_mode = #tpu.pipeline_mode<synchronous>, transform_indices = @transform_8, window_bounds = array<i64: 32, 1>}, {pipeline_mode = #tpu.pipeline_mode<synchronous>, transform_indices = @transform_9, window_bounds = array<i64: 64, 32>}, {pipeline_mode = #tpu.pipeline_mode<synchronous>, transform_indices = @transform_10, window_bounds = array<i64: 64, 1>}, {pipeline_mode = #tpu.pipeline_mode<synchronous>, transform_indices = @transform_11, window_bounds = array<i64: 64, 1>}, {pipeline_mode = #tpu.pipeline_mode<synchronous>, transform_indices = @transform_12, window_bounds = array<i64: 64, 64>}, {pipeline_mode = #tpu.pipeline_mode<synchronous>, transform_indices = @transform_13, window_bounds = array<i64: 64, 512>}, {pipeline_mode = #tpu.pipeline_mode<synchronous>, transform_indices = @transform_14, window_bounds = array<i64: 2, 64>}, {pipeline_mode = #tpu.pipeline_mode<synchronous>, transform_indices = @transform_15, window_bounds = array<i64: 512, 64>}, {pipeline_mode = #tpu.pipeline_mode<synchronous>, transform_indices = @transform_16, window_bounds = array<i64: 1, 64>}, {pipeline_mode = #tpu.pipeline_mode<synchronous>, transform_indices = @transform_17, window_bounds = array<i64: 64, 128>}, {pipeline_mode = #tpu.pipeline_mode<synchronous>, transform_indices = @transform_18, window_bounds = array<i64: 1, 128>}, {pipeline_mode = #tpu.pipeline_mode<synchronous>, transform_indices = @transform_19, window_bounds = array<i64: 2, 128>}]} {
    %c0 = arith.constant 0 : index
    %c0_0 = arith.constant 0 : index
    %0 = vector.load %arg2[%c0, %c0_0] : memref<32x18xbf16, #tpu.memory_space<vmem>>, vector<32x18xbf16>
    %c0_1 = arith.constant 0 : index
    %c0_2 = arith.constant 0 : index
    %1 = vector.load %arg1[%c0_1, %c0_2] : memref<18x256xbf16, #tpu.memory_space<vmem>>, vector<18x256xbf16>
    %cst = arith.constant dense<0.000000e+00> : vector<32x256xf32>
    %2 = tpu.matmul %0, %1, %cst {dimension_numbers = #tpu.dot_dimension_numbers<[1], [0], [0], [1], [0, 0, 1, 1], [], []>} : vector<32x18xbf16>, vector<18x256xbf16>, vector<32x256xf32> -> vector<32x256xf32>
    %c0_3 = arith.constant 0 : index
    %c0_4 = arith.constant 0 : index
    %3 = vector.load %arg3[%c0_3, %c0_4] : memref<32x1xf32, #tpu.memory_space<vmem>>, vector<32x1xf32>
    %4 = vector.broadcast %3 : vector<32x1xf32> to vector<32x256xf32>
    %5 = arith.mulf %2, %4 : vector<32x256xf32>
    %c0_5 = arith.constant 0 : index
    %c0_6 = arith.constant 0 : index
    %6 = vector.load %arg4[%c0_5, %c0_6] : memref<32x1xf32, #tpu.memory_space<vmem>>, vector<32x1xf32>
    %7 = vector.broadcast %6 : vector<32x1xf32> to vector<32x256xf32>
    %8 = arith.addf %5, %7 : vector<32x256xf32>
    %cst_7 = arith.constant 0.000000e+00 : f32
    %9 = vector.broadcast %cst_7 : f32 to vector<32x256xf32>
    %10 = arith.maximumf %8, %9 : vector<32x256xf32>
    %11 = arith.truncf %10 : vector<32x256xf32> to vector<32x256xbf16>
    %c0_8 = arith.constant 0 : index
    %c0_9 = arith.constant 0 : index
    %12 = vector.load %arg5[%c0_8, %c0_9] : memref<256x256xbf16, #tpu.memory_space<vmem>>, vector<256x256xbf16>
    %cst_10 = arith.constant dense<0.000000e+00> : vector<32x256xf32>
    %13 = tpu.matmul %11, %12, %cst_10 {dimension_numbers = #tpu.dot_dimension_numbers<[1], [0], [0], [1], [0, 0, 1, 1], [], []>} : vector<32x256xbf16>, vector<256x256xbf16>, vector<32x256xf32> -> vector<32x256xf32>
    %14 = vector.extract_strided_slice %13 {offsets = [0, 0], sizes = [32, 64], strides = [1, 1]} : vector<32x256xf32> to vector<32x64xf32>
    %15 = vector.extract_strided_slice %13 {offsets = [0, 64], sizes = [32, 64], strides = [1, 1]} : vector<32x256xf32> to vector<32x64xf32>
    %16 = arith.maximumf %14, %15 : vector<32x64xf32>
    %17 = vector.extract_strided_slice %13 {offsets = [0, 128], sizes = [32, 64], strides = [1, 1]} : vector<32x256xf32> to vector<32x64xf32>
    %18 = vector.extract_strided_slice %13 {offsets = [0, 192], sizes = [32, 64], strides = [1, 1]} : vector<32x256xf32> to vector<32x64xf32>
    %19 = arith.maximumf %17, %18 : vector<32x64xf32>
    %20 = arith.maximumf %16, %19 : vector<32x64xf32>
    %c0_11 = arith.constant 0 : index
    %c0_12 = arith.constant 0 : index
    %21 = vector.load %arg7[%c0_11, %c0_12] : memref<32x9xf32, #tpu.memory_space<vmem>>, vector<32x1xf32>
    %22 = vector.broadcast %21 : vector<32x1xf32> to vector<32x64xf32>
    %23 = arith.mulf %20, %22 : vector<32x64xf32>
    %c0_13 = arith.constant 0 : index
    %c1 = arith.constant 1 : index
    %24 = vector.load %arg7[%c0_13, %c1] : memref<32x9xf32, #tpu.memory_space<vmem>>, vector<32x1xf32>
    %25 = vector.broadcast %24 : vector<32x1xf32> to vector<32x64xf32>
    %26 = arith.mulf %20, %25 : vector<32x64xf32>
    %c0_14 = arith.constant 0 : index
    %c2 = arith.constant 2 : index
    %27 = vector.load %arg7[%c0_14, %c2] : memref<32x9xf32, #tpu.memory_space<vmem>>, vector<32x1xf32>
    %28 = vector.broadcast %27 : vector<32x1xf32> to vector<32x64xf32>
    %29 = arith.mulf %20, %28 : vector<32x64xf32>
    %c0_15 = arith.constant 0 : index
    %c3 = arith.constant 3 : index
    %30 = vector.load %arg7[%c0_15, %c3] : memref<32x9xf32, #tpu.memory_space<vmem>>, vector<32x1xf32>
    %31 = vector.broadcast %30 : vector<32x1xf32> to vector<32x64xf32>
    %32 = arith.mulf %20, %31 : vector<32x64xf32>
    %c0_16 = arith.constant 0 : index
    %c4 = arith.constant 4 : index
    %33 = vector.load %arg7[%c0_16, %c4] : memref<32x9xf32, #tpu.memory_space<vmem>>, vector<32x1xf32>
    %34 = vector.broadcast %33 : vector<32x1xf32> to vector<32x64xf32>
    %35 = arith.mulf %20, %34 : vector<32x64xf32>
    %c0_17 = arith.constant 0 : index
    %c5 = arith.constant 5 : index
    %36 = vector.load %arg7[%c0_17, %c5] : memref<32x9xf32, #tpu.memory_space<vmem>>, vector<32x1xf32>
    %37 = vector.broadcast %36 : vector<32x1xf32> to vector<32x64xf32>
    %38 = arith.mulf %20, %37 : vector<32x64xf32>
    %c0_18 = arith.constant 0 : index
    %c6 = arith.constant 6 : index
    %39 = vector.load %arg7[%c0_18, %c6] : memref<32x9xf32, #tpu.memory_space<vmem>>, vector<32x1xf32>
    %40 = vector.broadcast %39 : vector<32x1xf32> to vector<32x64xf32>
    %41 = arith.mulf %20, %40 : vector<32x64xf32>
    %c0_19 = arith.constant 0 : index
    %c7 = arith.constant 7 : index
    %42 = vector.load %arg7[%c0_19, %c7] : memref<32x9xf32, #tpu.memory_space<vmem>>, vector<32x1xf32>
    %43 = vector.broadcast %42 : vector<32x1xf32> to vector<32x64xf32>
    %44 = arith.mulf %20, %43 : vector<32x64xf32>
    %c0_20 = arith.constant 0 : index
    %c8 = arith.constant 8 : index
    %45 = vector.load %arg7[%c0_20, %c8] : memref<32x9xf32, #tpu.memory_space<vmem>>, vector<32x1xf32>
    %46 = vector.broadcast %45 : vector<32x1xf32> to vector<32x64xf32>
    %47 = arith.mulf %20, %46 : vector<32x64xf32>
    %48 = tpu.concatenate %23, %26, %29, %32, %35, %38, %41, %44, %47 in 1 : vector<32x64xf32>, vector<32x64xf32>, vector<32x64xf32>, vector<32x64xf32>, vector<32x64xf32>, vector<32x64xf32>, vector<32x64xf32>, vector<32x64xf32>, vector<32x64xf32> -> vector<32x576xf32>
    %49 = arith.truncf %48 : vector<32x576xf32> to vector<32x576xbf16>
    %c0_21 = arith.constant 0 : index
    %c0_22 = arith.constant 0 : index
    %50 = vector.load %arg6[%c0_21, %c0_22] : memref<576x64xbf16, #tpu.memory_space<vmem>>, vector<576x64xbf16>
    %cst_23 = arith.constant dense<0.000000e+00> : vector<32x64xf32>
    %51 = tpu.matmul %49, %50, %cst_23 {dimension_numbers = #tpu.dot_dimension_numbers<[1], [0], [0], [1], [0, 0, 1, 1], [], []>} : vector<32x576xbf16>, vector<576x64xbf16>, vector<32x64xf32> -> vector<32x64xf32>
    %c0_24 = arith.constant 0 : index
    %c0_25 = arith.constant 0 : index
    %52 = vector.load %arg8[%c0_24, %c0_25] : memref<32x1xf32, #tpu.memory_space<vmem>>, vector<32x1xf32>
    %53 = vector.broadcast %52 : vector<32x1xf32> to vector<32x64xf32>
    %54 = arith.mulf %51, %53 : vector<32x64xf32>
    %c0_26 = arith.constant 0 : index
    %c0_27 = arith.constant 0 : index
    %55 = vector.load %arg9[%c0_26, %c0_27] : memref<32x1xf32, #tpu.memory_space<vmem>>, vector<32x1xf32>
    %56 = vector.broadcast %55 : vector<32x1xf32> to vector<32x64xf32>
    %57 = arith.addf %54, %56 : vector<32x64xf32>
    %cst_28 = arith.constant 0.000000e+00 : f32
    %58 = vector.broadcast %cst_28 : f32 to vector<32x64xf32>
    %59 = arith.maximumf %57, %58 : vector<32x64xf32>
    %c0_29 = arith.constant 0 : index
    %c0_30 = arith.constant 0 : index
    %60 = vector.load %arg10[%c0_29, %c0_30] : memref<64x32xbf16, #tpu.memory_space<vmem>>, vector<64x32xbf16>
    %61 = arith.truncf %59 : vector<32x64xf32> to vector<32x64xbf16>
    %cst_31 = arith.constant dense<0.000000e+00> : vector<64x64xf32>
    %62 = tpu.matmul %60, %61, %cst_31 {dimension_numbers = #tpu.dot_dimension_numbers<[1], [0], [0], [1], [0, 0, 1, 1], [], []>} : vector<64x32xbf16>, vector<32x64xbf16>, vector<64x64xf32> -> vector<64x64xf32>
    %c0_32 = arith.constant 0 : index
    %c0_33 = arith.constant 0 : index
    %63 = vector.load %arg11[%c0_32, %c0_33] : memref<64x1xf32, #tpu.memory_space<vmem>>, vector<64x1xf32>
    %64 = vector.broadcast %63 : vector<64x1xf32> to vector<64x64xf32>
    %65 = arith.mulf %62, %64 : vector<64x64xf32>
    %c0_34 = arith.constant 0 : index
    %c0_35 = arith.constant 0 : index
    %66 = vector.load %arg12[%c0_34, %c0_35] : memref<64x1xf32, #tpu.memory_space<vmem>>, vector<64x1xf32>
    %67 = vector.broadcast %66 : vector<64x1xf32> to vector<64x64xf32>
    %68 = arith.addf %65, %67 : vector<64x64xf32>
    %cst_36 = arith.constant 0.000000e+00 : f32
    %69 = vector.broadcast %cst_36 : f32 to vector<64x64xf32>
    %70 = arith.maximumf %68, %69 : vector<64x64xf32>
    %71 = arith.truncf %70 : vector<64x64xf32> to vector<64x64xbf16>
    %c0_37 = arith.constant 0 : index
    %c0_38 = arith.constant 0 : index
    %72 = vector.load %arg13[%c0_37, %c0_38] : memref<64x64xbf16, #tpu.memory_space<vmem>>, vector<64x64xbf16>
    %cst_39 = arith.constant dense<0.000000e+00> : vector<64x64xf32>
    %73 = tpu.matmul %71, %72, %cst_39 {dimension_numbers = #tpu.dot_dimension_numbers<[1], [0], [0], [1], [0, 0, 1, 1], [], []>} : vector<64x64xbf16>, vector<64x64xbf16>, vector<64x64xf32> -> vector<64x64xf32>
    %74 = vector.extract_strided_slice %73 {offsets = [0, 0], sizes = [64, 16], strides = [1, 1]} : vector<64x64xf32> to vector<64x16xf32>
    %75 = vector.extract_strided_slice %73 {offsets = [0, 16], sizes = [64, 16], strides = [1, 1]} : vector<64x64xf32> to vector<64x16xf32>
    %76 = arith.maximumf %74, %75 : vector<64x16xf32>
    %77 = vector.extract_strided_slice %73 {offsets = [0, 32], sizes = [64, 16], strides = [1, 1]} : vector<64x64xf32> to vector<64x16xf32>
    %78 = vector.extract_strided_slice %73 {offsets = [0, 48], sizes = [64, 16], strides = [1, 1]} : vector<64x64xf32> to vector<64x16xf32>
    %79 = arith.maximumf %77, %78 : vector<64x16xf32>
    %80 = arith.maximumf %76, %79 : vector<64x16xf32>
    %81 = arith.truncf %80 : vector<64x16xf32> to vector<64x16xbf16>
    %82 = tpu.concatenate %81, %81, %81, %81, %81, %81, %81, %81, %81, %81, %81, %81, %81, %81, %81, %81 in 1 : vector<64x16xbf16>, vector<64x16xbf16>, vector<64x16xbf16>, vector<64x16xbf16>, vector<64x16xbf16>, vector<64x16xbf16>, vector<64x16xbf16>, vector<64x16xbf16>, vector<64x16xbf16>, vector<64x16xbf16>, vector<64x16xbf16>, vector<64x16xbf16>, vector<64x16xbf16>, vector<64x16xbf16>, vector<64x16xbf16>, vector<64x16xbf16> -> vector<64x256xbf16>
    %83 = tpu.concatenate %81, %81, %81, %81, %81, %81, %81, %81, %81, %81, %81, %81, %81, %81, %81, %81 in 1 : vector<64x16xbf16>, vector<64x16xbf16>, vector<64x16xbf16>, vector<64x16xbf16>, vector<64x16xbf16>, vector<64x16xbf16>, vector<64x16xbf16>, vector<64x16xbf16>, vector<64x16xbf16>, vector<64x16xbf16>, vector<64x16xbf16>, vector<64x16xbf16>, vector<64x16xbf16>, vector<64x16xbf16>, vector<64x16xbf16>, vector<64x16xbf16> -> vector<64x256xbf16>
    %84 = tpu.concatenate %82, %83 in 1 : vector<64x256xbf16>, vector<64x256xbf16> -> vector<64x512xbf16>
    %c0_40 = arith.constant 0 : index
    %c0_41 = arith.constant 0 : index
    %85 = vector.load %arg14[%c0_40, %c0_41] : memref<64x512xbf16, #tpu.memory_space<vmem>>, vector<64x512xbf16>
    %86 = arith.mulf %84, %85 : vector<64x512xbf16>
    %c0_42 = arith.constant 0 : index
    %c0_43 = arith.constant 0 : index
    %87 = vector.load %arg15[%c0_42, %c0_43] : memref<2x64xbf16, #tpu.memory_space<vmem>>, vector<2x64xbf16>
    %cst_44 = arith.constant dense<0.000000e+00> : vector<2x512xf32>
    %88 = tpu.matmul %87, %86, %cst_44 {dimension_numbers = #tpu.dot_dimension_numbers<[1], [0], [0], [1], [0, 0, 1, 1], [], []>} : vector<2x64xbf16>, vector<64x512xbf16>, vector<2x512xf32> -> vector<2x512xf32>
    %89 = arith.truncf %88 : vector<2x512xf32> to vector<2x512xbf16>
    %c0_45 = arith.constant 0 : index
    %c0_46 = arith.constant 0 : index
    %90 = vector.load %arg16[%c0_45, %c0_46] : memref<512x64xbf16, #tpu.memory_space<vmem>>, vector<512x64xbf16>
    %cst_47 = arith.constant dense<0.000000e+00> : vector<2x64xf32>
    %91 = tpu.matmul %89, %90, %cst_47 {dimension_numbers = #tpu.dot_dimension_numbers<[1], [0], [0], [1], [0, 0, 1, 1], [], []>} : vector<2x512xbf16>, vector<512x64xbf16>, vector<2x64xf32> -> vector<2x64xf32>
    %c0_48 = arith.constant 0 : index
    %c0_49 = arith.constant 0 : index
    %92 = vector.load %arg17[%c0_48, %c0_49] : memref<1x64xf32, #tpu.memory_space<vmem>>, vector<1x64xf32>
    %93 = vector.broadcast %92 : vector<1x64xf32> to vector<2x64xf32>
    %94 = arith.addf %91, %93 : vector<2x64xf32>
    %cst_50 = arith.constant 0.000000e+00 : f32
    %95 = vector.broadcast %cst_50 : f32 to vector<2x64xf32>
    %96 = arith.maximumf %94, %95 : vector<2x64xf32>
    %97 = arith.truncf %96 : vector<2x64xf32> to vector<2x64xbf16>
    %c0_51 = arith.constant 0 : index
    %c0_52 = arith.constant 0 : index
    %98 = vector.load %arg18[%c0_51, %c0_52] : memref<64x128xbf16, #tpu.memory_space<vmem>>, vector<64x128xbf16>
    %cst_53 = arith.constant dense<0.000000e+00> : vector<2x128xf32>
    %99 = tpu.matmul %97, %98, %cst_53 {dimension_numbers = #tpu.dot_dimension_numbers<[1], [0], [0], [1], [0, 0, 1, 1], [], []>} : vector<2x64xbf16>, vector<64x128xbf16>, vector<2x128xf32> -> vector<2x128xf32>
    %c0_54 = arith.constant 0 : index
    %c0_55 = arith.constant 0 : index
    %100 = vector.load %arg19[%c0_54, %c0_55] : memref<1x128xf32, #tpu.memory_space<vmem>>, vector<1x128xf32>
    %101 = vector.broadcast %100 : vector<1x128xf32> to vector<2x128xf32>
    %102 = arith.addf %99, %101 : vector<2x128xf32>
    %c0_56 = arith.constant 0 : index
    %c0_57 = arith.constant 0 : index
    %103 = vector.load %arg20[%c0_56, %c0_57] : memref<2x128xf32, #tpu.memory_space<vmem>>, vector<2x128xf32>
    tpu.vector_store %arg20[%c0_56, %c0_57], %102 {strides = array<i32>} : memref<2x128xf32, #tpu.memory_space<vmem>>, vector<2x128xf32>,
    return
  }
  func.func @transform_0(%arg0: i32) -> (i32, i32) {
    %c0_i32 = arith.constant 0 : i32
    %c0_i32_0 = arith.constant 0 : i32
    %c0_i32_1 = arith.constant 0 : i32
    return %c0_i32, %c0_i32_0 : i32, i32
  }
  func.func @transform_1(%arg0: i32) -> (i32, i32) {
    %c0_i32 = arith.constant 0 : i32
    %c0_i32_0 = arith.constant 0 : i32
    %c0_i32_1 = arith.constant 0 : i32
    return %c0_i32, %c0_i32_0 : i32, i32
  }
  func.func @transform_2(%arg0: i32) -> (i32, i32) {
    %c0_i32 = arith.constant 0 : i32
    %c0_i32_0 = arith.constant 0 : i32
    %c0_i32_1 = arith.constant 0 : i32
    return %c0_i32, %c0_i32_0 : i32, i32
  }
  func.func @transform_3(%arg0: i32) -> (i32, i32) {
    %c0_i32 = arith.constant 0 : i32
    %c0_i32_0 = arith.constant 0 : i32
    %c0_i32_1 = arith.constant 0 : i32
    return %c0_i32, %c0_i32_0 : i32, i32
  }
  func.func @transform_4(%arg0: i32) -> (i32, i32) {
    %c0_i32 = arith.constant 0 : i32
    %c0_i32_0 = arith.constant 0 : i32
    %c0_i32_1 = arith.constant 0 : i32
    return %c0_i32, %c0_i32_0 : i32, i32
  }
  func.func @transform_5(%arg0: i32) -> (i32, i32) {
    %c0_i32 = arith.constant 0 : i32
    %c0_i32_0 = arith.constant 0 : i32
    %c0_i32_1 = arith.constant 0 : i32
    return %c0_i32, %c0_i32_0 : i32, i32
  }
  func.func @transform_6(%arg0: i32) -> (i32, i32) {
    %c0_i32 = arith.constant 0 : i32
    %c0_i32_0 = arith.constant 0 : i32
    %c0_i32_1 = arith.constant 0 : i32
    return %c0_i32, %c0_i32_0 : i32, i32
  }
  func.func @transform_7(%arg0: i32) -> (i32, i32) {
    %c0_i32 = arith.constant 0 : i32
    %c0_i32_0 = arith.constant 0 : i32
    %c0_i32_1 = arith.constant 0 : i32
    return %c0_i32, %c0_i32_0 : i32, i32
  }
  func.func @transform_8(%arg0: i32) -> (i32, i32) {
    %c0_i32 = arith.constant 0 : i32
    %c0_i32_0 = arith.constant 0 : i32
    %c0_i32_1 = arith.constant 0 : i32
    return %c0_i32, %c0_i32_0 : i32, i32
  }
  func.func @transform_9(%arg0: i32) -> (i32, i32) {
    %c0_i32 = arith.constant 0 : i32
    %c0_i32_0 = arith.constant 0 : i32
    %c0_i32_1 = arith.constant 0 : i32
    return %c0_i32, %c0_i32_0 : i32, i32
  }
  func.func @transform_10(%arg0: i32) -> (i32, i32) {
    %c0_i32 = arith.constant 0 : i32
    %c0_i32_0 = arith.constant 0 : i32
    %c0_i32_1 = arith.constant 0 : i32
    return %c0_i32, %c0_i32_0 : i32, i32
  }
  func.func @transform_11(%arg0: i32) -> (i32, i32) {
    %c0_i32 = arith.constant 0 : i32
    %c0_i32_0 = arith.constant 0 : i32
    %c0_i32_1 = arith.constant 0 : i32
    return %c0_i32, %c0_i32_0 : i32, i32
  }
  func.func @transform_12(%arg0: i32) -> (i32, i32) {
    %c0_i32 = arith.constant 0 : i32
    %c0_i32_0 = arith.constant 0 : i32
    %c0_i32_1 = arith.constant 0 : i32
    return %c0_i32, %c0_i32_0 : i32, i32
  }
  func.func @transform_13(%arg0: i32) -> (i32, i32) {
    %c0_i32 = arith.constant 0 : i32
    %c0_i32_0 = arith.constant 0 : i32
    %c0_i32_1 = arith.constant 0 : i32
    return %c0_i32, %c0_i32_0 : i32, i32
  }
  func.func @transform_14(%arg0: i32) -> (i32, i32) {
    %c0_i32 = arith.constant 0 : i32
    %c0_i32_0 = arith.constant 0 : i32
    %c0_i32_1 = arith.constant 0 : i32
    return %c0_i32, %c0_i32_0 : i32, i32
  }
  func.func @transform_15(%arg0: i32) -> (i32, i32) {
    %c0_i32 = arith.constant 0 : i32
    %c0_i32_0 = arith.constant 0 : i32
    %c0_i32_1 = arith.constant 0 : i32
    return %c0_i32, %c0_i32_0 : i32, i32
  }
  func.func @transform_16(%arg0: i32) -> (i32, i32) {
    %c0_i32 = arith.constant 0 : i32
    %c0_i32_0 = arith.constant 0 : i32
    %c0_i32_1 = arith.constant 0 : i32
    return %c0_i32, %c0_i32_0 : i32, i32
  }
  func.func @transform_17(%arg0: i32) -> (i32, i32) {
    %c0_i32 = arith.constant 0 : i32
    %c0_i32_0 = arith.constant 0 : i32
    %c0_i32_1 = arith.constant 0 : i32
    return %c0_i32, %c0_i32_0 : i32, i32
  }
  func.func @transform_18(%arg0: i32) -> (i32, i32) {
    %c0_i32 = arith.constant 0 : i32
    %c0_i32_0 = arith.constant 0 : i32
    %c0_i32_1 = arith.constant 0 : i32
    return %c0_i32, %c0_i32_0 : i32, i32
  }
  func.func @transform_19(%arg0: i32) -> (i32, i32) {
    %c0_i32 = arith.constant 0 : i32
    %c0_i32_0 = arith.constant 0 : i32
    %c0_i32_1 = arith.constant 0 : i32
    return %c0_i32, %c0_i32_0 : i32, i32
  }
}

</mosaic_0001>

<llo_original>
// kernel: efficient_audio_classifier_forward.1
$region0: #{efficient_audio_classifier_forward.1}
  #allocation0 [shape = 'u32[]', space=smem, size = 0x4, offset = 0x4, fixed_abs, tag = 'smem constant byte address 0x4 - core index']
  #allocation1 [shape = 'u32[144,128]{1,0:T(1,128)}', space=vmem, size = 0x12000, scoped, tag = 'internal scratch']
  %s0 = inlined_call_operand.vmem [shape: bf16[18,256], index: 0, kind: input, shape index: {}]
  %s1 = inlined_call_operand.vmem [shape: bf16[32,18], index: 1, kind: input, shape index: {}]
  %s2 = inlined_call_operand.vmem [shape: f32[32,1], index: 2, kind: input, shape index: {}]
  %s3 = inlined_call_operand.vmem [shape: f32[32,1], index: 3, kind: input, shape index: {}]
  %s4 = inlined_call_operand.vmem [shape: bf16[256,256], index: 4, kind: input, shape index: {}]
  %s5 = inlined_call_operand.vmem [shape: bf16[576,64], index: 5, kind: input, shape index: {}]
  %s6 = inlined_call_operand.vmem [shape: f32[32,9], index: 6, kind: input, shape index: {}]
  %s7 = inlined_call_operand.vmem [shape: f32[32,1], index: 7, kind: input, shape index: {}]
  %s8 = inlined_call_operand.vmem [shape: f32[32,1], index: 8, kind: input, shape index: {}]
  %s9 = inlined_call_operand.vmem [shape: bf16[64,32], index: 9, kind: input, shape index: {}]
  %s10 = inlined_call_operand.vmem [shape: f32[64,1], index: 10, kind: input, shape index: {}]
  %s11 = inlined_call_operand.vmem [shape: f32[64,1], index: 11, kind: input, shape index: {}]
  %s12 = inlined_call_operand.vmem [shape: bf16[64,64], index: 12, kind: input, shape index: {}]
  %s13 = inlined_call_operand.vmem [shape: bf16[64,512], index: 13, kind: input, shape index: {}]
  %s14 = inlined_call_operand.vmem [shape: bf16[2,64], index: 14, kind: input, shape index: {}]
  %s15 = inlined_call_operand.vmem [shape: bf16[512,64], index: 15, kind: input, shape index: {}]
  %s16 = inlined_call_operand.vmem [shape: f32[1,64], index: 16, kind: input, shape index: {}]
  %s17 = inlined_call_operand.vmem [shape: bf16[64,128], index: 17, kind: input, shape index: {}]
  %s18 = inlined_call_operand.vmem [shape: f32[1,128], index: 18, kind: input, shape index: {}]
  %s19 = inlined_call_operand.hbm [shape: f32[2,128], index: 19, kind: output, shape index: {}]
  %s20 = sld [smem:[#allocation0]]
  $region86: #{efficient_audio_classifier_forward.1} parent=0
    _
  %s22 = ssub.s32 1, %s20
  %s23 = scalar_select 0, %s22, %s20
  $region1: #{efficient_audio_classifier_forward.1} parent=0
    #allocation2 [shape = 'u8[1024]{0}', space=vmem, size = 0x400, scoped, tag = 'output window, operand 0, single buffered']
    #allocation3 [shape = 's32[1]{0}', space=sflag, size = 0x4, scoped, tag = 'scoped memory for efficient_audio_classifier_forward.1']
    %24 = vsyncpa [#allocation3], 0
    // Predicated region
    $region2: #{efficient_audio_classifier_forward.1} parent=1 // pred_check
      _
    $region3: #{efficient_audio_classifier_forward.1} parent=1 // pred_check_branch
      %26 = sbr.rel (0) target = $region5
    $region4: #{efficient_audio_classifier_forward.1} parent=1 // pred_region
      _
    $region5: #{efficient_audio_classifier_forward.1} parent=1 // pred_fallthru
      _
    // Predicated region
    $region6: #{efficient_audio_classifier_forward.1} parent=1 // pred_check
      _
    $region7: #{efficient_audio_classifier_forward.1} parent=1 // pred_check_branch
      %28 = sbr.rel (0) target = $region9
    $region8: #{efficient_audio_classifier_forward.1} parent=1 // pred_region
      _
    $region9: #{efficient_audio_classifier_forward.1} parent=1 // pred_fallthru
      _
    // Predicated region
    $region10: #{efficient_audio_classifier_forward.1} parent=1 // pred_check
      _
    $region11: #{efficient_audio_classifier_forward.1} parent=1 // pred_check_branch
      %30 = sbr.rel (0) target = $region13
    $region12: #{efficient_audio_classifier_forward.1} parent=1 // pred_region
      _
    $region13: #{efficient_audio_classifier_forward.1} parent=1 // pred_fallthru
      _
    // Predicated region
    $region14: #{efficient_audio_classifier_forward.1} parent=1 // pred_check
      _
    $region15: #{efficient_audio_classifier_forward.1} parent=1 // pred_check_branch
      %32 = sbr.rel (0) target = $region17
    $region16: #{efficient_audio_classifier_forward.1} parent=1 // pred_region
      _
    $region17: #{efficient_audio_classifier_forward.1} parent=1 // pred_fallthru
      _
    // Predicated region
    $region18: #{efficient_audio_classifier_forward.1} parent=1 // pred_check
      _
    $region19: #{efficient_audio_classifier_forward.1} parent=1 // pred_check_branch
      %34 = sbr.rel (0) target = $region21
    $region20: #{efficient_audio_classifier_forward.1} parent=1 // pred_region
      _
    $region21: #{efficient_audio_classifier_forward.1} parent=1 // pred_fallthru
      _
    // Predicated region
    $region22: #{efficient_audio_classifier_forward.1} parent=1 // pred_check
      _
    $region23: #{efficient_audio_classifier_forward.1} parent=1 // pred_check_branch
      %36 = sbr.rel (0) target = $region25
    $region24: #{efficient_audio_classifier_forward.1} parent=1 // pred_region
      _
    $region25: #{efficient_audio_classifier_forward.1} parent=1 // pred_fallthru
      _
    // Predicated region
    $region26: #{efficient_audio_classifier_forward.1} parent=1 // pred_check
      _
    $region27: #{efficient_audio_classifier_forward.1} parent=1 // pred_check_branch
      %38 = sbr.rel (0) target = $region29
    $region28: #{efficient_audio_classifier_forward.1} parent=1 // pred_region
      _
    $region29: #{efficient_audio_classifier_forward.1} parent=1 // pred_fallthru
      _
    // Predicated region
    $region30: #{efficient_audio_classifier_forward.1} parent=1 // pred_check
      _
    $region31: #{efficient_audio_classifier_forward.1} parent=1 // pred_check_branch
      %40 = sbr.rel (0) target = $region33
    $region32: #{efficient_audio_classifier_forward.1} parent=1 // pred_region
      _
    $region33: #{efficient_audio_classifier_forward.1} parent=1 // pred_fallthru
      _
    // Predicated region
    $region34: #{efficient_audio_classifier_forward.1} parent=1 // pred_check
      _
    $region35: #{efficient_audio_classifier_forward.1} parent=1 // pred_check_branch
      %42 = sbr.rel (0) target = $region37
    $region36: #{efficient_audio_classifier_forward.1} parent=1 // pred_region
      _
    $region37: #{efficient_audio_classifier_forward.1} parent=1 // pred_fallthru
      _
    // Predicated region
    $region38: #{efficient_audio_classifier_forward.1} parent=1 // pred_check
      _
    $region39: #{efficient_audio_classifier_forward.1} parent=1 // pred_check_branch
      %44 = sbr.rel (0) target = $region41
    $region40: #{efficient_audio_classifier_forward.1} parent=1 // pred_region
      _
    $region41: #{efficient_audio_classifier_forward.1} parent=1 // pred_fallthru
      _
    // Predicated region
    $region42: #{efficient_audio_classifier_forward.1} parent=1 // pred_check
      _
    $region43: #{efficient_audio_classifier_forward.1} parent=1 // pred_check_branch
      %46 = sbr.rel (0) target = $region45
    $region44: #{efficient_audio_classifier_forward.1} parent=1 // pred_region
      _
    $region45: #{efficient_audio_classifier_forward.1} parent=1 // pred_fallthru
      _
    // Predicated region
    $region46: #{efficient_audio_classifier_forward.1} parent=1 // pred_check
      _
    $region47: #{efficient_audio_classifier_forward.1} parent=1 // pred_check_branch
      %48 = sbr.rel (0) target = $region49
    $region48: #{efficient_audio_classifier_forward.1} parent=1 // pred_region
      _
    $region49: #{efficient_audio_classifier_forward.1} parent=1 // pred_fallthru
      _
    // Predicated region
    $region50: #{efficient_audio_classifier_forward.1} parent=1 // pred_check
      _
    $region51: #{efficient_audio_classifier_forward.1} parent=1 // pred_check_branch
      %50 = sbr.rel (0) target = $region53
    $region52: #{efficient_audio_classifier_forward.1} parent=1 // pred_region
      _
    $region53: #{efficient_audio_classifier_forward.1} parent=1 // pred_fallthru
      _
    // Predicated region
    $region54: #{efficient_audio_classifier_forward.1} parent=1 // pred_check
      _
    $region55: #{efficient_audio_classifier_forward.1} parent=1 // pred_check_branch
      %52 = sbr.rel (0) target = $region57
    $region56: #{efficient_audio_classifier_forward.1} parent=1 // pred_region
      _
    $region57: #{efficient_audio_classifier_forward.1} parent=1 // pred_fallthru
      _
    // Predicated region
    $region58: #{efficient_audio_classifier_forward.1} parent=1 // pred_check
      _
    $region59: #{efficient_audio_classifier_forward.1} parent=1 // pred_check_branch
      %54 = sbr.rel (0) target = $region61
    $region60: #{efficient_audio_classifier_forward.1} parent=1 // pred_region
      _
    $region61: #{efficient_audio_classifier_forward.1} parent=1 // pred_fallthru
      _
    // Predicated region
    $region62: #{efficient_audio_classifier_forward.1} parent=1 // pred_check
      _
    $region63: #{efficient_audio_classifier_forward.1} parent=1 // pred_check_branch
      %56 = sbr.rel (0) target = $region65
    $region64: #{efficient_audio_classifier_forward.1} parent=1 // pred_region
      _
    $region65: #{efficient_audio_classifier_forward.1} parent=1 // pred_fallthru
      _
    // Predicated region
    $region66: #{efficient_audio_classifier_forward.1} parent=1 // pred_check
      _
    $region67: #{efficient_audio_classifier_forward.1} parent=1 // pred_check_branch
      %58 = sbr.rel (0) target = $region69
    $region68: #{efficient_audio_classifier_forward.1} parent=1 // pred_region
      _
    $region69: #{efficient_audio_classifier_forward.1} parent=1 // pred_fallthru
      _
    // Predicated region
    $region70: #{efficient_audio_classifier_forward.1} parent=1 // pred_check
      _
    $region71: #{efficient_audio_classifier_forward.1} parent=1 // pred_check_branch
      %60 = sbr.rel (0) target = $region73
    $region72: #{efficient_audio_classifier_forward.1} parent=1 // pred_region
      _
    $region73: #{efficient_audio_classifier_forward.1} parent=1 // pred_fallthru
      _
    // Predicated region
    $region74: #{efficient_audio_classifier_forward.1} parent=1 // pred_check
      _
    $region75: #{efficient_audio_classifier_forward.1} parent=1 // pred_check_branch
      %62 = sbr.rel (0) target = $region77
    $region76: #{efficient_audio_classifier_forward.1} parent=1 // pred_region
      _
    $region77: #{efficient_audio_classifier_forward.1} parent=1 // pred_fallthru
      _
    %v64 = vld [vmem:[%s1] sm:$0xf]
    %v65 = vld [vmem:[%s1 + $0x4] sm:$0xf]
    %v66 = vld [vmem:[%s1 + $0x8] sm:$0xf]
    %v67 = vld [vmem:[%s1 + $0xc] sm:$0xf]
    %v68 = vld [vmem:[%s0] sm:$0xff]
    %v69 = vld [vmem:[%s0 + $0x8] sm:$0xff]
    %v70 = vld [vmem:[%s0 + $0x10] sm:$0x11]
    %v75 = vunpack.c.l.b16 %v64
    %v76 = vunpack.c.l.b16 %v65
    %v77 = vunpack.c.l.b16 %v66
    %v78 = vunpack.c.l.b16 %v67
    %v79 = vpack.c.b16 %v76, %v75
    %v80 = vpack.c.b16 %v78, %v77
    %v84 = vunpack.c.l.b16 %v68
    %v85 = vunpack.c.h.b16 %v68
    %v86 = vunpack.c.l.b16 %v69
    %v87 = vunpack.c.h.b16 %v69
    %v88 = vunpack.c.l.b16 %v70
    %v89 = vunpack.c.h.b16 %v70
    %v90 = vpack.c.b16 %v86, %v84
    %v91 = vpack.c.b16 %v87, %v85
    %v92 = vpack.c.b16 %v88, %v88
    %v93 = vpack.c.b16 %v89, %v89
    %vm96 = vcmask 146432
    %v98 = vsel %vm96, %v79, 0
    %v101 = vsel %vm96, %v80, 0
    %vm103 = vcmask 1040384
    %v105 = vsel %vm103, %v92, 0
    %v108 = vsel %vm103, %v93, 0
    %110 = vmatprep.subr.bf16.mxu0 %v91
    %111 = vmatpush1.bf16.msra.mxu0 %v90
    %112 = vmatprep.subr.bf16.mxu0 %v108
    %113 = vmatpush1.bf16.msra.mxu0 %v105
    %114 = vmatprep.subr.bf16.mxu0 0
    %115 = vmatpush1.bf16.msra.mxu0 0
    %116 = vmatprep.subr.bf16.mxu0 0
    %117 = vmatpush1.bf16.msra.mxu0 0
    %118 = vmatprep.subr.bf16.mxu0 0
    %119 = vmatpush1.bf16.msra.mxu0 0
    %120 = vmatprep.subr.bf16.mxu0 0
    %121 = vmatpush1.bf16.msra.mxu0 0
    %122 = vmatprep.subr.bf16.mxu0 0
    %123 = vmatpush1.bf16.msra.mxu0 0
    %124 = vmatprep.subr.bf16.mxu0 0
    %125 = vmatpush1.bf16.msra.mxu0 0
    %126 = vmatprep.subr.bf16.mxu0 0
    %127 = vmatpush1.bf16.msra.mxu0 0
    %128 = vmatprep.subr.bf16.mxu0 0
    %129 = vmatpush1.bf16.msra.mxu0 0
    %130 = vmatprep.subr.bf16.mxu0 0
    %131 = vmatpush1.bf16.msra.mxu0 0
    %132 = vmatprep.subr.bf16.mxu0 0
    %133 = vmatpush1.bf16.msra.mxu0 0
    %134 = vmatprep.subr.bf16.mxu0 0
    %135 = vmatpush1.bf16.msra.mxu0 0
    %136 = vmatprep.subr.bf16.mxu0 0
    %137 = vmatpush1.bf16.msra.mxu0 0
    %138 = vmatprep.subr.bf16.mxu0 0
    %139 = vmatpush1.bf16.msra.mxu0 0
    %140 = vmatprep.subr.bf16.mxu0 0
    %141 = vmatpush1.bf16.msra.mxu0 0
    %142 = vmatprep.mubr.bf16.mxu0 0
    %143 = vmatmul.mubr.bf16.gmra.mrb[0].mxu0 %v98
    %v144 = vpop.f32.mrb[0].mxu0
    %v145 = vadd.f32 0.0, %v144
    %v146 = vpop.f32.mrb[0].mxu0
    %v147 = vadd.f32 0.0, %v146
    %v148 = vpop.f32.mrb[0].mxu0
    %v149 = vadd.f32 0.0, %v148
    %v150 = vpop.f32.mrb[0].mxu0
    %v151 = vadd.f32 0.0, %v150
    %152 = vmatprep.mubr.bf16.mxu0 0
    %153 = vmatmul.mubr.bf16.gmra.mrb[0].mxu0 %v101
    %v154 = vpop.f32.mrb[0].mxu0
    %v155 = vadd.f32 0.0, %v154
    %v156 = vpop.f32.mrb[0].mxu0
    %v157 = vadd.f32 0.0, %v156
    %v158 = vpop.f32.mrb[0].mxu0
    %v159 = vadd.f32 0.0, %v158
    %v160 = vpop.f32.mrb[0].mxu0
    %v161 = vadd.f32 0.0, %v160
    %162 = vdwg.mxu0
    %v163 = vld [vmem:[%s2] sm:$0xff]
    %v164 = vld [vmem:[%s2 + $0x8] sm:$0xff]
    %v165 = vld [vmem:[%s2 + $0x10] sm:$0xff]
    %v166 = vld [vmem:[%s2 + $0x18] sm:$0xff]
    %168 = vset.pattern.permute.xlu0 0
    %169 = vperm.xlu0 %168, %v163
    %v170 = vpop.permute.xlu0 %169
    %173 = vset.pattern.permute.xlu0 0
    %174 = vperm.xlu0 %173, %v164
    %v175 = vpop.permute.xlu0 %174
    %178 = vset.pattern.permute.xlu0 0
    %179 = vperm.xlu0 %178, %v165
    %v180 = vpop.permute.xlu0 %179
    %183 = vset.pattern.permute.xlu0 0
    %184 = vperm.xlu0 %183, %v166
    %v185 = vpop.permute.xlu0 %184
    %v187 = vmul.f32 %v145, %v170
    %v188 = vmul.f32 %v147, %v170
    %v189 = vmul.f32 %v149, %v175
    %v190 = vmul.f32 %v151, %v175
    %v191 = vmul.f32 %v155, %v180
    %v192 = vmul.f32 %v157, %v180
    %v193 = vmul.f32 %v159, %v185
    %v194 = vmul.f32 %v161, %v185
    %v195 = vld [vmem:[%s3] sm:$0xff]
    %v196 = vld [vmem:[%s3 + $0x8] sm:$0xff]
    %v197 = vld [vmem:[%s3 + $0x10] sm:$0xff]
    %v198 = vld [vmem:[%s3 + $0x18] sm:$0xff]
    %200 = vset.pattern.permute.xlu0 0
    %201 = vperm.xlu0 %200, %v195
    %v202 = vpop.permute.xlu0 %201
    %205 = vset.pattern.permute.xlu0 0
    %206 = vperm.xlu0 %205, %v196
    %v207 = vpop.permute.xlu0 %206
    %210 = vset.pattern.permute.xlu0 0
    %211 = vperm.xlu0 %210, %v197
    %v212 = vpop.permute.xlu0 %211
    %215 = vset.pattern.permute.xlu0 0
    %216 = vperm.xlu0 %215, %v198
    %v217 = vpop.permute.xlu0 %216
    %v219 = vadd.f32 %v187, %v202
    %v220 = vadd.f32 %v188, %v202
    %v221 = vadd.f32 %v189, %v207
    %v222 = vadd.f32 %v190, %v207
    %v223 = vadd.f32 %v191, %v212
    %v224 = vadd.f32 %v192, %v212
    %v225 = vadd.f32 %v193, %v217
    %v226 = vadd.f32 %v194, %v217
    %v227 = vmax.f32 %v219, 0.0
    %v228 = vmax.f32 %v220, 0.0
    %v229 = vmax.f32 %v221, 0.0
    %v230 = vmax.f32 %v222, 0.0
    %v231 = vmax.f32 %v223, 0.0
    %v232 = vmax.f32 %v224, 0.0
    %v233 = vmax.f32 %v225, 0.0
    %v234 = vmax.f32 %v226, 0.0
    %v235 = vpack.c.bf16 %v229, %v227
    %v236 = vpack.c.bf16 %v230, %v228
    %v237 = vpack.c.bf16 %v233, %v231
    %v238 = vpack.c.bf16 %v234, %v232
    %v239 = vld [vmem:[%s4] sm:$0xff]
    %v240 = vld [vmem:[%s4 + $0x8] sm:$0xff]
    %v241 = vld [vmem:[%s4 + $0x10] sm:$0xff]
    %v242 = vld [vmem:[%s4 + $0x18] sm:$0xff]
    %v243 = vld [vmem:[%s4 + $0x20] sm:$0xff]
    %v244 = vld [vmem:[%s4 + $0x28] sm:$0xff]
    %v245 = vld [vmem:[%s4 + $0x30] sm:$0xff]
    %v246 = vld [vmem:[%s4 + $0x38] sm:$0xff]
    %v247 = vld [vmem:[%s4 + $0x40] sm:$0xff]
    %v248 = vld [vmem:[%s4 + $0x48] sm:$0xff]
    %v249 = vld [vmem:[%s4 + $0x50] sm:$0xff]
    %v250 = vld [vmem:[%s4 + $0x58] sm:$0xff]
    %v251 = vld [vmem:[%s4 + $0x60] sm:$0xff]
    %v252 = vld [vmem:[%s4 + $0x68] sm:$0xff]
    %v253 = vld [vmem:[%s4 + $0x70] sm:$0xff]
    %v254 = vld [vmem:[%s4 + $0x78] sm:$0xff]
    %v255 = vld [vmem:[%s4 + $0x80] sm:$0xff]
    %v256 = vld [vmem:[%s4 + $0x88] sm:$0xff]
    %v257 = vld [vmem:[%s4 + $0x90] sm:$0xff]
    %v258 = vld [vmem:[%s4 + $0x98] sm:$0xff]
    %v259 = vld [vmem:[%s4 + $0xa0] sm:$0xff]
    %v260 = vld [vmem:[%s4 + $0xa8] sm:$0xff]
    %v261 = vld [vmem:[%s4 + $0xb0] sm:$0xff]
    %v262 = vld [vmem:[%s4 + $0xb8] sm:$0xff]
    %v263 = vld [vmem:[%s4 + $0xc0] sm:$0xff]
    %v264 = vld [vmem:[%s4 + $0xc8] sm:$0xff]
    %v265 = vld [vmem:[%s4 + $0xd0] sm:$0xff]
    %v266 = vld [vmem:[%s4 + $0xd8] sm:$0xff]
    %v267 = vld [vmem:[%s4 + $0xe0] sm:$0xff]
    %v268 = vld [vmem:[%s4 + $0xe8] sm:$0xff]
    %v269 = vld [vmem:[%s4 + $0xf0] sm:$0xff]
    %v270 = vld [vmem:[%s4 + $0xf8] sm:$0xff]
    %v303 = vunpack.c.l.b16 %v239
    %v304 = vunpack.c.h.b16 %v239
    %v305 = vunpack.c.l.b16 %v240
    %v306 = vunpack.c.h.b16 %v240
    %v307 = vunpack.c.l.b16 %v241
    %v308 = vunpack.c.h.b16 %v241
    %v309 = vunpack.c.l.b16 %v242
    %v310 = vunpack.c.h.b16 %v242
    %v311 = vunpack.c.l.b16 %v243
    %v312 = vunpack.c.h.b16 %v243
    %v313 = vunpack.c.l.b16 %v244
    %v314 = vunpack.c.h.b16 %v244
    %v315 = vunpack.c.l.b16 %v245
    %v316 = vunpack.c.h.b16 %v245
    %v317 = vunpack.c.l.b16 %v246
    %v318 = vunpack.c.h.b16 %v246
    %v319 = vunpack.c.l.b16 %v247
    %v320 = vunpack.c.h.b16 %v247
    %v321 = vunpack.c.l.b16 %v248
    %v322 = vunpack.c.h.b16 %v248
    %v323 = vunpack.c.l.b16 %v249
    %v324 = vunpack.c.h.b16 %v249
    %v325 = vunpack.c.l.b16 %v250
    %v326 = vunpack.c.h.b16 %v250
    %v327 = vunpack.c.l.b16 %v251
    %v328 = vunpack.c.h.b16 %v251
    %v329 = vunpack.c.l.b16 %v252
    %v330 = vunpack.c.h.b16 %v252
    %v331 = vunpack.c.l.b16 %v253
    %v332 = vunpack.c.h.b16 %v253
    %v333 = vunpack.c.l.b16 %v254
    %v334 = vunpack.c.h.b16 %v254
    %v335 = vunpack.c.l.b16 %v255
    %v336 = vunpack.c.h.b16 %v255
    %v337 = vunpack.c.l.b16 %v256
    %v338 = vunpack.c.h.b16 %v256
    %v339 = vunpack.c.l.b16 %v257
    %v340 = vunpack.c.h.b16 %v257
    %v341 = vunpack.c.l.b16 %v258
    %v342 = vunpack.c.h.b16 %v258
    %v343 = vunpack.c.l.b16 %v259
    %v344 = vunpack.c.h.b16 %v259
    %v345 = vunpack.c.l.b16 %v260
    %v346 = vunpack.c.h.b16 %v260
    %v347 = vunpack.c.l.b16 %v261
    %v348 = vunpack.c.h.b16 %v261
    %v349 = vunpack.c.l.b16 %v262
    %v350 = vunpack.c.h.b16 %v262
    %v351 = vunpack.c.l.b16 %v263
    %v352 = vunpack.c.h.b16 %v263
    %v353 = vunpack.c.l.b16 %v264
    %v354 = vunpack.c.h.b16 %v264
    %v355 = vunpack.c.l.b16 %v265
    %v356 = vunpack.c.h.b16 %v265
    %v357 = vunpack.c.l.b16 %v266
    %v358 = vunpack.c.h.b16 %v266
    %v359 = vunpack.c.l.b16 %v267
    %v360 = vunpack.c.h.b16 %v267
    %v361 = vunpack.c.l.b16 %v268
    %v362 = vunpack.c.h.b16 %v268
    %v363 = vunpack.c.l.b16 %v269
    %v364 = vunpack.c.h.b16 %v269
    %v365 = vunpack.c.l.b16 %v270
    %v366 = vunpack.c.h.b16 %v270
    %v367 = vpack.c.b16 %v305, %v303
    %v368 = vpack.c.b16 %v306, %v304
    %v369 = vpack.c.b16 %v309, %v307
    %v370 = vpack.c.b16 %v310, %v308
    %v371 = vpack.c.b16 %v313, %v311
    %v372 = vpack.c.b16 %v314, %v312
    %v373 = vpack.c.b16 %v317, %v315
    %v374 = vpack.c.b16 %v318, %v316
    %v375 = vpack.c.b16 %v321, %v319
    %v376 = vpack.c.b16 %v322, %v320
    %v377 = vpack.c.b16 %v325, %v323
    %v378 = vpack.c.b16 %v326, %v324
    %v379 = vpack.c.b16 %v329, %v327
    %v380 = vpack.c.b16 %v330, %v328
    %v381 = vpack.c.b16 %v333, %v331
    %v382 = vpack.c.b16 %v334, %v332
    %v383 = vpack.c.b16 %v337, %v335
    %v384 = vpack.c.b16 %v338, %v336
    %v385 = vpack.c.b16 %v341, %v339
    %v386 = vpack.c.b16 %v342, %v340
    %v387 = vpack.c.b16 %v345, %v343
    %v388 = vpack.c.b16 %v346, %v344
    %v389 = vpack.c.b16 %v349, %v347
    %v390 = vpack.c.b16 %v350, %v348
    %v391 = vpack.c.b16 %v353, %v351
    %v392 = vpack.c.b16 %v354, %v352
    %v393 = vpack.c.b16 %v357, %v355
    %v394 = vpack.c.b16 %v358, %v356
    %v395 = vpack.c.b16 %v361, %v359
    %v396 = vpack.c.b16 %v362, %v360
    %v397 = vpack.c.b16 %v365, %v363
    %v398 = vpack.c.b16 %v366, %v364
    %431 = vmatprep.subr.bf16.mxu0 %v368
    %432 = vmatpush1.bf16.msra.mxu0 %v367
    %433 = vmatprep.subr.bf16.mxu0 %v370
    %434 = vmatpush1.bf16.msra.mxu0 %v369
    %435 = vmatprep.subr.bf16.mxu0 %v372
    %436 = vmatpush1.bf16.msra.mxu0 %v371
    %437 = vmatprep.subr.bf16.mxu0 %v374
    %438 = vmatpush1.bf16.msra.mxu0 %v373
    %439 = vmatprep.subr.bf16.mxu0 %v376
    %440 = vmatpush1.bf16.msra.mxu0 %v375
    %441 = vmatprep.subr.bf16.mxu0 %v378
    %442 = vmatpush1.bf16.msra.mxu0 %v377
    %443 = vmatprep.subr.bf16.mxu0 %v380
    %444 = vmatpush1.bf16.msra.mxu0 %v379
    %445 = vmatprep.subr.bf16.mxu0 %v382
    %446 = vmatpush1.bf16.msra.mxu0 %v381
    %447 = vmatprep.subr.bf16.mxu0 %v384
    %448 = vmatpush1.bf16.msra.mxu0 %v383
    %449 = vmatprep.subr.bf16.mxu0 %v386
    %450 = vmatpush1.bf16.msra.mxu0 %v385
    %451 = vmatprep.subr.bf16.mxu0 %v388
    %452 = vmatpush1.bf16.msra.mxu0 %v387
    %453 = vmatprep.subr.bf16.mxu0 %v390
    %454 = vmatpush1.bf16.msra.mxu0 %v389
    %455 = vmatprep.subr.bf16.mxu0 %v392
    %456 = vmatpush1.bf16.msra.mxu0 %v391
    %457 = vmatprep.subr.bf16.mxu0 %v394
    %458 = vmatpush1.bf16.msra.mxu0 %v393
    %459 = vmatprep.subr.bf16.mxu0 %v396
    %460 = vmatpush1.bf16.msra.mxu0 %v395
    %461 = vmatprep.subr.bf16.mxu0 %v398
    %462 = vmatpush1.bf16.msra.mxu0 %v397
    %463 = vmatprep.mubr.bf16.mxu0 %v236
    %464 = vmatmul.mubr.bf16.gmra.mrb[0].mxu0 %v235
    %v465 = vpop.f32.mrb[0].mxu0
    %v466 = vadd.f32 0.0, %v465
    %v467 = vpop.f32.mrb[0].mxu0
    %v468 = vadd.f32 0.0, %v467
    %v469 = vpop.f32.mrb[0].mxu0
    %v470 = vadd.f32 0.0, %v469
    %v471 = vpop.f32.mrb[0].mxu0
    %v472 = vadd.f32 0.0, %v471
    %473 = vmatprep.mubr.bf16.mxu0 %v238
    %474 = vmatmul.mubr.bf16.gmra.mrb[0].mxu0 %v237
    %v475 = vpop.f32.mrb[0].mxu0
    %v476 = vadd.f32 0.0, %v475
    %v477 = vpop.f32.mrb[0].mxu0
    %v478 = vadd.f32 0.0, %v477
    %v479 = vpop.f32.mrb[0].mxu0
    %v480 = vadd.f32 0.0, %v479
    %v481 = vpop.f32.mrb[0].mxu0
    %v482 = vadd.f32 0.0, %v481
    %483 = vdwg.mxu0
    %488 = vrot.lane.b32.xlu0 %v466, 64
    %v489 = vpop.permute.xlu0 %488
    %490 = vrot.lane.b32.xlu0 %v470, 64
    %v491 = vpop.permute.xlu0 %490
    %492 = vrot.lane.b32.xlu0 %v476, 64
    %v493 = vpop.permute.xlu0 %492
    %494 = vrot.lane.b32.xlu0 %v480, 64
    %v495 = vpop.permute.xlu0 %494
    %v500 = vmax.f32 %v466, %v489
    %v501 = vmax.f32 %v470, %v491
    %v502 = vmax.f32 %v476, %v493
    %v503 = vmax.f32 %v480, %v495
    %508 = vrot.lane.b32.xlu0 %v468, 64
    %v509 = vpop.permute.xlu0 %508
    %510 = vrot.lane.b32.xlu0 %v472, 64
    %v511 = vpop.permute.xlu0 %510
    %512 = vrot.lane.b32.xlu0 %v478, 64
    %v513 = vpop.permute.xlu0 %512
    %514 = vrot.lane.b32.xlu0 %v482, 64
    %v515 = vpop.permute.xlu0 %514
    %v520 = vmax.f32 %v468, %v509
    %v521 = vmax.f32 %v472, %v511
    %v522 = vmax.f32 %v478, %v513
    %v523 = vmax.f32 %v482, %v515
    %v524 = vmax.f32 %v500, %v520
    %v525 = vmax.f32 %v501, %v521
    %v526 = vmax.f32 %v502, %v522
    %v527 = vmax.f32 %v503, %v523
    %v528 = vld [vmem:[%s6] sm:$0xff]
    %v529 = vld [vmem:[%s6 + $0x8] sm:$0xff]
    %v530 = vld [vmem:[%s6 + $0x10] sm:$0xff]
    %v531 = vld [vmem:[%s6 + $0x18] sm:$0xff]
    %533 = vset.pattern.permute.xlu0 0
    %534 = vperm.xlu0 %533, %v528
    %v535 = vpop.permute.xlu0 %534
    %538 = vset.pattern.permute.xlu0 0
    %539 = vperm.xlu0 %538, %v529
    %v540 = vpop.permute.xlu0 %539
    %543 = vset.pattern.permute.xlu0 0
    %544 = vperm.xlu0 %543, %v530
    %v545 = vpop.permute.xlu0 %544
    %548 = vset.pattern.permute.xlu0 0
    %549 = vperm.xlu0 %548, %v531
    %v550 = vpop.permute.xlu0 %549
    %v552 = vmul.f32 %v524, %v535
    %v553 = vmul.f32 %v525, %v540
    %v554 = vmul.f32 %v526, %v545
    %v555 = vmul.f32 %v527, %v550
    %556 = vset.pattern.permute.xlu0 1
    %557 = vperm.xlu0 %556, %v528
    %v558 = vpop.permute.xlu0 %557
    %560 = vset.pattern.permute.xlu0 1
    %561 = vperm.xlu0 %560, %v529
    %v562 = vpop.permute.xlu0 %561
    %564 = vset.pattern.permute.xlu0 1
    %565 = vperm.xlu0 %564, %v530
    %v566 = vpop.permute.xlu0 %565
    %568 = vset.pattern.permute.xlu0 1
    %569 = vperm.xlu0 %568, %v531
    %v570 = vpop.permute.xlu0 %569
    %v572 = vmul.f32 %v524, %v558
    %v573 = vmul.f32 %v525, %v562
    %v574 = vmul.f32 %v526, %v566
    %v575 = vmul.f32 %v527, %v570
    %576 = vset.pattern.permute.xlu0 2
    %577 = vperm.xlu0 %576, %v528
    %v578 = vpop.permute.xlu0 %577
    %580 = vset.pattern.permute.xlu0 2
    %581 = vperm.xlu0 %580, %v529
    %v582 = vpop.permute.xlu0 %581
    %584 = vset.pattern.permute.xlu0 2
    %585 = vperm.xlu0 %584, %v530
    %v586 = vpop.permute.xlu0 %585
    %588 = vset.pattern.permute.xlu0 2
    %589 = vperm.xlu0 %588, %v531
    %v590 = vpop.permute.xlu0 %589
    %v592 = vmul.f32 %v524, %v578
    %v593 = vmul.f32 %v525, %v582
    %v594 = vmul.f32 %v526, %v586
    %v595 = vmul.f32 %v527, %v590
    %596 = vset.pattern.permute.xlu0 3
    %597 = vperm.xlu0 %596, %v528
    %v598 = vpop.permute.xlu0 %597
    %600 = vset.pattern.permute.xlu0 3
    %601 = vperm.xlu0 %600, %v529
    %v602 = vpop.permute.xlu0 %601
    %604 = vset.pattern.permute.xlu0 3
    %605 = vperm.xlu0 %604, %v530
    %v606 = vpop.permute.xlu0 %605
    %608 = vset.pattern.permute.xlu0 3
    %609 = vperm.xlu0 %608, %v531
    %v610 = vpop.permute.xlu0 %609
    %v612 = vmul.f32 %v524, %v598
    %v613 = vmul.f32 %v525, %v602
    %v614 = vmul.f32 %v526, %v606
    %v615 = vmul.f32 %v527, %v610
    %616 = vset.pattern.permute.xlu0 4
    %617 = vperm.xlu0 %616, %v528
    %v618 = vpop.permute.xlu0 %617
    %620 = vset.pattern.permute.xlu0 4
    %621 = vperm.xlu0 %620, %v529
    %v622 = vpop.permute.xlu0 %621
    %624 = vset.pattern.permute.xlu0 4
    %625 = vperm.xlu0 %624, %v530
    %v626 = vpop.permute.xlu0 %625
    %628 = vset.pattern.permute.xlu0 4
    %629 = vperm.xlu0 %628, %v531
    %v630 = vpop.permute.xlu0 %629
    %v632 = vmul.f32 %v524, %v618
    %v633 = vmul.f32 %v525, %v622
    %v634 = vmul.f32 %v526, %v626
    %v635 = vmul.f32 %v527, %v630
    %636 = vset.pattern.permute.xlu0 5
    %637 = vperm.xlu0 %636, %v528
    %v638 = vpop.permute.xlu0 %637
    %640 = vset.pattern.permute.xlu0 5
    %641 = vperm.xlu0 %640, %v529
    %v642 = vpop.permute.xlu0 %641
    %644 = vset.pattern.permute.xlu0 5
    %645 = vperm.xlu0 %644, %v530
    %v646 = vpop.permute.xlu0 %645
    %648 = vset.pattern.permute.xlu0 5
    %649 = vperm.xlu0 %648, %v531
    %v650 = vpop.permute.xlu0 %649
    %v652 = vmul.f32 %v524, %v638
    %v653 = vmul.f32 %v525, %v642
    %v654 = vmul.f32 %v526, %v646
    %v655 = vmul.f32 %v527, %v650
    %656 = vset.pattern.permute.xlu0 6
    %657 = vperm.xlu0 %656, %v528
    %v658 = vpop.permute.xlu0 %657
    %660 = vset.pattern.permute.xlu0 6
    %661 = vperm.xlu0 %660, %v529
    %v662 = vpop.permute.xlu0 %661
    %664 = vset.pattern.permute.xlu0 6
    %665 = vperm.xlu0 %664, %v530
    %v666 = vpop.permute.xlu0 %665
    %668 = vset.pattern.permute.xlu0 6
    %669 = vperm.xlu0 %668, %v531
    %v670 = vpop.permute.xlu0 %669
    %v672 = vmul.f32 %v524, %v658
    %v673 = vmul.f32 %v525, %v662
    %v674 = vmul.f32 %v526, %v666
    %v675 = vmul.f32 %v527, %v670
    %676 = vset.pattern.permute.xlu0 7
    %677 = vperm.xlu0 %676, %v528
    %v678 = vpop.permute.xlu0 %677
    %680 = vset.pattern.permute.xlu0 7
    %681 = vperm.xlu0 %680, %v529
    %v682 = vpop.permute.xlu0 %681
    %684 = vset.pattern.permute.xlu0 7
    %685 = vperm.xlu0 %684, %v530
    %v686 = vpop.permute.xlu0 %685
    %688 = vset.pattern.permute.xlu0 7
    %689 = vperm.xlu0 %688, %v531
    %v690 = vpop.permute.xlu0 %689
    %v692 = vmul.f32 %v524, %v678
    %v693 = vmul.f32 %v525, %v682
    %v694 = vmul.f32 %v526, %v686
    %v695 = vmul.f32 %v527, %v690
    %696 = vset.pattern.permute.xlu0 8
    %697 = vperm.xlu0 %696, %v528
    %v698 = vpop.permute.xlu0 %697
    %700 = vset.pattern.permute.xlu0 8
    %701 = vperm.xlu0 %700, %v529
    %v702 = vpop.permute.xlu0 %701
    %704 = vset.pattern.permute.xlu0 8
    %705 = vperm.xlu0 %704, %v530
    %v706 = vpop.permute.xlu0 %705
    %708 = vset.pattern.permute.xlu0 8
    %709 = vperm.xlu0 %708, %v531
    %v710 = vpop.permute.xlu0 %709
    %v712 = vmul.f32 %v524, %v698
    %v713 = vmul.f32 %v525, %v702
    %v714 = vmul.f32 %v526, %v706
    %v715 = vmul.f32 %v527, %v710
    %720 = vrot.lane.b32.xlu0 %v572, 64
    %v721 = vpop.permute.xlu0 %720
    %722 = vrot.lane.b32.xlu0 %v573, 64
    %v723 = vpop.permute.xlu0 %722
    %724 = vrot.lane.b32.xlu0 %v574, 64
    %v725 = vpop.permute.xlu0 %724
    %726 = vrot.lane.b32.xlu0 %v575, 64
    %v727 = vpop.permute.xlu0 %726
    %736 = vrot.lane.b32.xlu0 %v612, 64
    %v737 = vpop.permute.xlu0 %736
    %738 = vrot.lane.b32.xlu0 %v613, 64
    %v739 = vpop.permute.xlu0 %738
    %740 = vrot.lane.b32.xlu0 %v614, 64
    %v741 = vpop.permute.xlu0 %740
    %742 = vrot.lane.b32.xlu0 %v615, 64
    %v743 = vpop.permute.xlu0 %742
    %752 = vrot.lane.b32.xlu0 %v652, 64
    %v753 = vpop.permute.xlu0 %752
    %754 = vrot.lane.b32.xlu0 %v653, 64
    %v755 = vpop.permute.xlu0 %754
    %756 = vrot.lane.b32.xlu0 %v654, 64
    %v757 = vpop.permute.xlu0 %756
    %758 = vrot.lane.b32.xlu0 %v655, 64
    %v759 = vpop.permute.xlu0 %758
    %768 = vrot.lane.b32.xlu0 %v692, 64
    %v769 = vpop.permute.xlu0 %768
    %770 = vrot.lane.b32.xlu0 %v693, 64
    %v771 = vpop.permute.xlu0 %770
    %772 = vrot.lane.b32.xlu0 %v694, 64
    %v773 = vpop.permute.xlu0 %772
    %774 = vrot.lane.b32.xlu0 %v695, 64
    %v775 = vpop.permute.xlu0 %774
    %vm780 = vcmask 523264
    %v781 = vsel %vm780, %v552, %v721
    %v782 = vsel %vm780, %v553, %v723
    %v783 = vsel %vm780, %v554, %v725
    %v784 = vsel %vm780, %v555, %v727
    %v785 = vsel %vm780, %v592, %v737
    %v786 = vsel %vm780, %v593, %v739
    %v787 = vsel %vm780, %v594, %v741
    %v788 = vsel %vm780, %v595, %v743
    %v789 = vsel %vm780, %v632, %v753
    %v790 = vsel %vm780, %v633, %v755
    %v791 = vsel %vm780, %v634, %v757
    %v792 = vsel %vm780, %v635, %v759
    %v793 = vsel %vm780, %v672, %v769
    %v794 = vsel %vm780, %v673, %v771
    %v795 = vsel %vm780, %v674, %v773
    %v796 = vsel %vm780, %v675, %v775
    %v797 = vpack.c.bf16 %v782, %v781
    %v798 = vpack.c.bf16 %v786, %v785
    %v799 = vpack.c.bf16 %v790, %v789
    %v800 = vpack.c.bf16 %v794, %v793
    %v801 = vpack.c.bf16 %v713, %v712
    %v802 = vpack.c.bf16 %v784, %v783
    %v803 = vpack.c.bf16 %v788, %v787
    %v804 = vpack.c.bf16 %v792, %v791
    %v805 = vpack.c.bf16 %v796, %v795
    %v806 = vpack.c.bf16 %v715, %v714
    %v807 = vld [vmem:[%s5] sm:$0xf]
    %v808 = vld [vmem:[%s5 + $0x4] sm:$0xf]
    %v809 = vld [vmem:[%s5 + $0x8] sm:$0xf]
    %v810 = vld [vmem:[%s5 + $0xc] sm:$0xf]
    %v811 = vld [vmem:[%s5 + $0x10] sm:$0xf]
    %v812 = vld [vmem:[%s5 + $0x14] sm:$0xf]
    %v813 = vld [vmem:[%s5 + $0x18] sm:$0xf]
    %v814 = vld [vmem:[%s5 + $0x1c] sm:$0xf]
    %v815 = vld [vmem:[%s5 + $0x20] sm:$0xf]
    %v816 = vld [vmem:[%s5 + $0x24] sm:$0xf]
    %v817 = vld [vmem:[%s5 + $0x28] sm:$0xf]
    %v818 = vld [vmem:[%s5 + $0x2c] sm:$0xf]
    %v819 = vld [vmem:[%s5 + $0x30] sm:$0xf]
    %v820 = vld [vmem:[%s5 + $0x34] sm:$0xf]
    %v821 = vld [vmem:[%s5 + $0x38] sm:$0xf]
    %v822 = vld [vmem:[%s5 + $0x3c] sm:$0xf]
    %v823 = vld [vmem:[%s5 + $0x40] sm:$0xf]
    %v824 = vld [vmem:[%s5 + $0x44] sm:$0xf]
    %v825 = vld [vmem:[%s5 + $0x48] sm:$0xf]
    %v826 = vld [vmem:[%s5 + $0x4c] sm:$0xf]
    %v827 = vld [vmem:[%s5 + $0x50] sm:$0xf]
    %v828 = vld [vmem:[%s5 + $0x54] sm:$0xf]
    %v829 = vld [vmem:[%s5 + $0x58] sm:$0xf]
    %v830 = vld [vmem:[%s5 + $0x5c] sm:$0xf]
    %v831 = vld [vmem:[%s5 + $0x60] sm:$0xf]
    %v832 = vld [vmem:[%s5 + $0x64] sm:$0xf]
    %v833 = vld [vmem:[%s5 + $0x68] sm:$0xf]
    %v834 = vld [vmem:[%s5 + $0x6c] sm:$0xf]
    %v835 = vld [vmem:[%s5 + $0x70] sm:$0xf]
    %v836 = vld [vmem:[%s5 + $0x74] sm:$0xf]
    %v837 = vld [vmem:[%s5 + $0x78] sm:$0xf]
    %v838 = vld [vmem:[%s5 + $0x7c] sm:$0xf]
    %v839 = vld [vmem:[%s5 + $0x80] sm:$0xf]
    %v840 = vld [vmem:[%s5 + $0x84] sm:$0xf]
    %v841 = vld [vmem:[%s5 + $0x88] sm:$0xf]
    %v842 = vld [vmem:[%s5 + $0x8c] sm:$0xf]
    %v843 = vld [vmem:[%s5 + $0x90] sm:$0xf]
    %v844 = vld [vmem:[%s5 + $0x94] sm:$0xf]
    %v845 = vld [vmem:[%s5 + $0x98] sm:$0xf]
    %v846 = vld [vmem:[%s5 + $0x9c] sm:$0xf]
    %v847 = vld [vmem:[%s5 + $0xa0] sm:$0xf]
    %v848 = vld [vmem:[%s5 + $0xa4] sm:$0xf]
    %v849 = vld [vmem:[%s5 + $0xa8] sm:$0xf]
    %v850 = vld [vmem:[%s5 + $0xac] sm:$0xf]
    %v851 = vld [vmem:[%s5 + $0xb0] sm:$0xf]
    %v852 = vld [vmem:[%s5 + $0xb4] sm:$0xf]
    %v853 = vld [vmem:[%s5 + $0xb8] sm:$0xf]
    %v854 = vld [vmem:[%s5 + $0xbc] sm:$0xf]
    %v855 = vld [vmem:[%s5 + $0xc0] sm:$0xf]
    %v856 = vld [vmem:[%s5 + $0xc4] sm:$0xf]
    %v857 = vld [vmem:[%s5 + $0xc8] sm:$0xf]
    %v858 = vld [vmem:[%s5 + $0xcc] sm:$0xf]
    %v859 = vld [vmem:[%s5 + $0xd0] sm:$0xf]
    %v860 = vld [vmem:[%s5 + $0xd4] sm:$0xf]
    %v861 = vld [vmem:[%s5 + $0xd8] sm:$0xf]
    %v862 = vld [vmem:[%s5 + $0xdc] sm:$0xf]
    %v863 = vld [vmem:[%s5 + $0xe0] sm:$0xf]
    %v864 = vld [vmem:[%s5 + $0xe4] sm:$0xf]
    %v865 = vld [vmem:[%s5 + $0xe8] sm:$0xf]
    %v866 = vld [vmem:[%s5 + $0xec] sm:$0xf]
    %v867 = vld [vmem:[%s5 + $0xf0] sm:$0xf]
    %v868 = vld [vmem:[%s5 + $0xf4] sm:$0xf]
    %v869 = vld [vmem:[%s5 + $0xf8] sm:$0xf]
    %v870 = vld [vmem:[%s5 + $0xfc] sm:$0xf]
    %v871 = vld [vmem:[%s5 + $0x100] sm:$0xf]
    %v872 = vld [vmem:[%s5 + $0x104] sm:$0xf]
    %v873 = vld [vmem:[%s5 + $0x108] sm:$0xf]
    %v874 = vld [vmem:[%s5 + $0x10c] sm:$0xf]
    %v875 = vld [vmem:[%s5 + $0x110] sm:$0xf]
    %v876 = vld [vmem:[%s5 + $0x114] sm:$0xf]
    %v877 = vld [vmem:[%s5 + $0x118] sm:$0xf]
    %v878 = vld [vmem:[%s5 + $0x11c] sm:$0xf]
    %v951 = vunpack.c.l.b16 %v807
    %v952 = vunpack.c.l.b16 %v808
    %v953 = vunpack.c.l.b16 %v809
    %v954 = vunpack.c.l.b16 %v810
    %v955 = vunpack.c.l.b16 %v811
    %v956 = vunpack.c.l.b16 %v812
    %v957 = vunpack.c.l.b16 %v813
    %v958 = vunpack.c.l.b16 %v814
    %v959 = vunpack.c.l.b16 %v815
    %v960 = vunpack.c.l.b16 %v816
    %v961 = vunpack.c.l.b16 %v817
    %v962 = vunpack.c.l.b16 %v818
    %v963 = vunpack.c.l.b16 %v819
    %v964 = vunpack.c.l.b16 %v820
    %v965 = vunpack.c.l.b16 %v821
    %v966 = vunpack.c.l.b16 %v822
    %v967 = vunpack.c.l.b16 %v823
    %v968 = vunpack.c.l.b16 %v824
    %v969 = vunpack.c.l.b16 %v825
    %v970 = vunpack.c.l.b16 %v826
    %v971 = vunpack.c.l.b16 %v827
    %v972 = vunpack.c.l.b16 %v828
    %v973 = vunpack.c.l.b16 %v829
    %v974 = vunpack.c.l.b16 %v830
    %v975 = vunpack.c.l.b16 %v831
    %v976 = vunpack.c.l.b16 %v832
    %v977 = vunpack.c.l.b16 %v833
    %v978 = vunpack.c.l.b16 %v834
    %v979 = vunpack.c.l.b16 %v835
    %v980 = vunpack.c.l.b16 %v836
    %v981 = vunpack.c.l.b16 %v837
    %v982 = vunpack.c.l.b16 %v838
    %v983 = vunpack.c.l.b16 %v839
    %v984 = vunpack.c.l.b16 %v840
    %v985 = vunpack.c.l.b16 %v841
    %v986 = vunpack.c.l.b16 %v842
    %v987 = vunpack.c.l.b16 %v843
    %v988 = vunpack.c.l.b16 %v844
    %v989 = vunpack.c.l.b16 %v845
    %v990 = vunpack.c.l.b16 %v846
    %v991 = vunpack.c.l.b16 %v847
    %v992 = vunpack.c.l.b16 %v848
    %v993 = vunpack.c.l.b16 %v849
    %v994 = vunpack.c.l.b16 %v850
    %v995 = vunpack.c.l.b16 %v851
    %v996 = vunpack.c.l.b16 %v852
    %v997 = vunpack.c.l.b16 %v853
    %v998 = vunpack.c.l.b16 %v854
    %v999 = vunpack.c.l.b16 %v855
    %v1000 = vunpack.c.l.b16 %v856
    %v1001 = vunpack.c.l.b16 %v857
    %v1002 = vunpack.c.l.b16 %v858
    %v1003 = vunpack.c.l.b16 %v859
    %v1004 = vunpack.c.l.b16 %v860
    %v1005 = vunpack.c.l.b16 %v861
    %v1006 = vunpack.c.l.b16 %v862
    %v1007 = vunpack.c.l.b16 %v863
    %v1008 = vunpack.c.l.b16 %v864
    %v1009 = vunpack.c.l.b16 %v865
    %v1010 = vunpack.c.l.b16 %v866
    %v1011 = vunpack.c.l.b16 %v867
    %v1012 = vunpack.c.l.b16 %v868
    %v1013 = vunpack.c.l.b16 %v869
    %v1014 = vunpack.c.l.b16 %v870
    %v1015 = vunpack.c.l.b16 %v871
    %v1016 = vunpack.c.l.b16 %v872
    %v1017 = vunpack.c.l.b16 %v873
    %v1018 = vunpack.c.l.b16 %v874
    %v1019 = vunpack.c.l.b16 %v875
    %v1020 = vunpack.c.l.b16 %v876
    %v1021 = vunpack.c.l.b16 %v877
    %v1022 = vunpack.c.l.b16 %v878
    %v1023 = vpack.c.b16 %v952, %v951
    %v1024 = vpack.c.b16 %v954, %v953
    %v1025 = vpack.c.b16 %v956, %v955
    %v1026 = vpack.c.b16 %v958, %v957
    %v1027 = vpack.c.b16 %v960, %v959
    %v1028 = vpack.c.b16 %v962, %v961
    %v1029 = vpack.c.b16 %v964, %v963
    %v1030 = vpack.c.b16 %v966, %v965
    %v1031 = vpack.c.b16 %v968, %v967
    %v1032 = vpack.c.b16 %v970, %v969
    %v1033 = vpack.c.b16 %v972, %v971
    %v1034 = vpack.c.b16 %v974, %v973
    %v1035 = vpack.c.b16 %v976, %v975
    %v1036 = vpack.c.b16 %v978, %v977
    %v1037 = vpack.c.b16 %v980, %v979
    %v1038 = vpack.c.b16 %v982, %v981
    %v1039 = vpack.c.b16 %v984, %v983
    %v1040 = vpack.c.b16 %v986, %v985
    %v1041 = vpack.c.b16 %v988, %v987
    %v1042 = vpack.c.b16 %v990, %v989
    %v1043 = vpack.c.b16 %v992, %v991
    %v1044 = vpack.c.b16 %v994, %v993
    %v1045 = vpack.c.b16 %v996, %v995
    %v1046 = vpack.c.b16 %v998, %v997
    %v1047 = vpack.c.b16 %v1000, %v999
    %v1048 = vpack.c.b16 %v1002, %v1001
    %v1049 = vpack.c.b16 %v1004, %v1003
    %v1050 = vpack.c.b16 %v1006, %v1005
    %v1051 = vpack.c.b16 %v1008, %v1007
    %v1052 = vpack.c.b16 %v1010, %v1009
    %v1053 = vpack.c.b16 %v1012, %v1011
    %v1054 = vpack.c.b16 %v1014, %v1013
    %v1055 = vpack.c.b16 %v1016, %v1015
    %v1056 = vpack.c.b16 %v1018, %v1017
    %v1057 = vpack.c.b16 %v1020, %v1019
    %v1058 = vpack.c.b16 %v1022, %v1021
    %v1096 = vsel %vm780, %v801, 0
    %v1099 = vsel %vm780, %v806, 0
    %1101 = vmatprep.subr.bf16.mxu0 0
    %1102 = vmatpush1.bf16.msra.mxu0 %v1023
    %1103 = vmatprep.subr.bf16.mxu0 0
    %1104 = vmatpush1.bf16.msra.mxu0 %v1024
    %1105 = vmatprep.subr.bf16.mxu0 0
    %1106 = vmatpush1.bf16.msra.mxu0 %v1025
    %1107 = vmatprep.subr.bf16.mxu0 0
    %1108 = vmatpush1.bf16.msra.mxu0 %v1026
    %1109 = vmatprep.subr.bf16.mxu0 0
    %1110 = vmatpush1.bf16.msra.mxu0 %v1027
    %1111 = vmatprep.subr.bf16.mxu0 0
    %1112 = vmatpush1.bf16.msra.mxu0 %v1028
    %1113 = vmatprep.subr.bf16.mxu0 0
    %1114 = vmatpush1.bf16.msra.mxu0 %v1029
    %1115 = vmatprep.subr.bf16.mxu0 0
    %1116 = vmatpush1.bf16.msra.mxu0 %v1030
    %1117 = vmatprep.subr.bf16.mxu0 0
    %1118 = vmatpush1.bf16.msra.mxu0 %v1031
    %1119 = vmatprep.subr.bf16.mxu0 0
    %1120 = vmatpush1.bf16.msra.mxu0 %v1032
    %1121 = vmatprep.subr.bf16.mxu0 0
    %1122 = vmatpush1.bf16.msra.mxu0 %v1033
    %1123 = vmatprep.subr.bf16.mxu0 0
    %1124 = vmatpush1.bf16.msra.mxu0 %v1034
    %1125 = vmatprep.subr.bf16.mxu0 0
    %1126 = vmatpush1.bf16.msra.mxu0 %v1035
    %1127 = vmatprep.subr.bf16.mxu0 0
    %1128 = vmatpush1.bf16.msra.mxu0 %v1036
    %1129 = vmatprep.subr.bf16.mxu0 0
    %1130 = vmatpush1.bf16.msra.mxu0 %v1037
    %1131 = vmatprep.subr.bf16.mxu0 0
    %1132 = vmatpush1.bf16.msra.mxu0 %v1038
    %1133 = vmatprep.mubr.bf16.mxu0 %v798
    %1134 = vmatmul.mubr.bf16.gmra.mrb[0].mxu0 %v797
    %v1135 = vpop.f32.mrb[0].mxu0
    %v1136 = vadd.f32 0.0, %v1135
    %v1137 = vpop.f32.mrb[0].mxu0
    %v1138 = vpop.f32.mrb[0].mxu0
    %v1139 = vadd.f32 0.0, %v1138
    %v1140 = vpop.f32.mrb[0].mxu0
    %1141 = vmatprep.mubr.bf16.mxu0 %v803
    %1142 = vmatmul.mubr.bf16.gmra.mrb[0].mxu0 %v802
    %v1143 = vpop.f32.mrb[0].mxu0
    %v1144 = vadd.f32 0.0, %v1143
    %v1145 = vpop.f32.mrb[0].mxu0
    %v1146 = vpop.f32.mrb[0].mxu0
    %v1147 = vadd.f32 0.0, %v1146
    %v1148 = vpop.f32.mrb[0].mxu0
    %1149 = vdwg.mxu0
    %1150 = vmatprep.subr.bf16.mxu0 0
    %1151 = vmatpush1.bf16.msra.mxu0 %v1039
    %1152 = vmatprep.subr.bf16.mxu0 0
    %1153 = vmatpush1.bf16.msra.mxu0 %v1040
    %1154 = vmatprep.subr.bf16.mxu0 0
    %1155 = vmatpush1.bf16.msra.mxu0 %v1041
    %1156 = vmatprep.subr.bf16.mxu0 0
    %1157 = vmatpush1.bf16.msra.mxu0 %v1042
    %1158 = vmatprep.subr.bf16.mxu0 0
    %1159 = vmatpush1.bf16.msra.mxu0 %v1043
    %1160 = vmatprep.subr.bf16.mxu0 0
    %1161 = vmatpush1.bf16.msra.mxu0 %v1044
    %1162 = vmatprep.subr.bf16.mxu0 0
    %1163 = vmatpush1.bf16.msra.mxu0 %v1045
    %1164 = vmatprep.subr.bf16.mxu0 0
    %1165 = vmatpush1.bf16.msra.mxu0 %v1046
    %1166 = vmatprep.subr.bf16.mxu0 0
    %1167 = vmatpush1.bf16.msra.mxu0 %v1047
    %1168 = vmatprep.subr.bf16.mxu0 0
    %1169 = vmatpush1.bf16.msra.mxu0 %v1048
    %1170 = vmatprep.subr.bf16.mxu0 0
    %1171 = vmatpush1.bf16.msra.mxu0 %v1049
    %1172 = vmatprep.subr.bf16.mxu0 0
    %1173 = vmatpush1.bf16.msra.mxu0 %v1050
    %1174 = vmatprep.subr.bf16.mxu0 0
    %1175 = vmatpush1.bf16.msra.mxu0 %v1051
    %1176 = vmatprep.subr.bf16.mxu0 0
    %1177 = vmatpush1.bf16.msra.mxu0 %v1052
    %1178 = vmatprep.subr.bf16.mxu0 0
    %1179 = vmatpush1.bf16.msra.mxu0 %v1053
    %1180 = vmatprep.subr.bf16.mxu0 0
    %1181 = vmatpush1.bf16.msra.mxu0 %v1054
    %1182 = vmatprep.mubr.bf16.mxu0 %v800
    %1183 = vmatmul.mubr.bf16.gmra.mrb[0].mxu0 %v799
    %v1184 = vpop.f32.mrb[0].mxu0
    %v1185 = vadd.f32 %v1136, %v1184
    %v1186 = vpop.f32.mrb[0].mxu0
    %v1187 = vpop.f32.mrb[0].mxu0
    %v1188 = vadd.f32 %v1139, %v1187
    %v1189 = vpop.f32.mrb[0].mxu0
    %1190 = vmatprep.mubr.bf16.mxu0 %v805
    %1191 = vmatmul.mubr.bf16.gmra.mrb[0].mxu0 %v804
    %v1192 = vpop.f32.mrb[0].mxu0
    %v1193 = vadd.f32 %v1144, %v1192
    %v1194 = vpop.f32.mrb[0].mxu0
    %v1195 = vpop.f32.mrb[0].mxu0
    %v1196 = vadd.f32 %v1147, %v1195
    %v1197 = vpop.f32.mrb[0].mxu0
    %1198 = vdwg.mxu0
    %1199 = vmatprep.subr.bf16.mxu0 0
    %1200 = vmatpush1.bf16.msra.mxu0 %v1055
    %1201 = vmatprep.subr.bf16.mxu0 0
    %1202 = vmatpush1.bf16.msra.mxu0 %v1056
    %1203 = vmatprep.subr.bf16.mxu0 0
    %1204 = vmatpush1.bf16.msra.mxu0 %v1057
    %1205 = vmatprep.subr.bf16.mxu0 0
    %1206 = vmatpush1.bf16.msra.mxu0 %v1058
    %1207 = vmatprep.subr.bf16.mxu0 0
    %1208 = vmatpush1.bf16.msra.mxu0 0
    %1209 = vmatprep.subr.bf16.mxu0 0
    %1210 = vmatpush1.bf16.msra.mxu0 0
    %1211 = vmatprep.subr.bf16.mxu0 0
    %1212 = vmatpush1.bf16.msra.mxu0 0
    %1213 = vmatprep.subr.bf16.mxu0 0
    %1214 = vmatpush1.bf16.msra.mxu0 0
    %1215 = vmatprep.subr.bf16.mxu0 0
    %1216 = vmatpush1.bf16.msra.mxu0 0
    %1217 = vmatprep.subr.bf16.mxu0 0
    %1218 = vmatpush1.bf16.msra.mxu0 0
    %1219 = vmatprep.subr.bf16.mxu0 0
    %1220 = vmatpush1.bf16.msra.mxu0 0
    %1221 = vmatprep.subr.bf16.mxu0 0
    %1222 = vmatpush1.bf16.msra.mxu0 0
    %1223 = vmatprep.subr.bf16.mxu0 0
    %1224 = vmatpush1.bf16.msra.mxu0 0
    %1225 = vmatprep.subr.bf16.mxu0 0
    %1226 = vmatpush1.bf16.msra.mxu0 0
    %1227 = vmatprep.subr.bf16.mxu0 0
    %1228 = vmatpush1.bf16.msra.mxu0 0
    %1229 = vmatprep.subr.bf16.mxu0 0
    %1230 = vmatpush1.bf16.msra.mxu0 0
    %1231 = vmatprep.mubr.bf16.mxu0 0
    %1232 = vmatmul.mubr.bf16.gmra.mrb[0].mxu0 %v1096
    %v1233 = vpop.f32.mrb[0].mxu0
    %v1234 = vadd.f32 %v1185, %v1233
    %v1235 = vpop.f32.mrb[0].mxu0
    %v1236 = vpop.f32.mrb[0].mxu0
    %v1237 = vadd.f32 %v1188, %v1236
    %v1238 = vpop.f32.mrb[0].mxu0
    %1239 = vmatprep.mubr.bf16.mxu0 0
    %1240 = vmatmul.mubr.bf16.gmra.mrb[0].mxu0 %v1099
    %v1241 = vpop.f32.mrb[0].mxu0
    %v1242 = vadd.f32 %v1193, %v1241
    %v1243 = vpop.f32.mrb[0].mxu0
    %v1244 = vpop.f32.mrb[0].mxu0
    %v1245 = vadd.f32 %v1196, %v1244
    %v1246 = vpop.f32.mrb[0].mxu0
    %1247 = vdwg.mxu0
    %v1248 = vld [vmem:[%s7] sm:$0xff]
    %v1249 = vld [vmem:[%s7 + $0x8] sm:$0xff]
    %v1250 = vld [vmem:[%s7 + $0x10] sm:$0xff]
    %v1251 = vld [vmem:[%s7 + $0x18] sm:$0xff]
    %1253 = vset.pattern.permute.xlu0 0
    %1254 = vperm.xlu0 %1253, %v1248
    %v1255 = vpop.permute.xlu0 %1254
    %1258 = vset.pattern.permute.xlu0 0
    %1259 = vperm.xlu0 %1258, %v1249
    %v1260 = vpop.permute.xlu0 %1259
    %1263 = vset.pattern.permute.xlu0 0
    %1264 = vperm.xlu0 %1263, %v1250
    %v1265 = vpop.permute.xlu0 %1264
    %1268 = vset.pattern.permute.xlu0 0
    %1269 = vperm.xlu0 %1268, %v1251
    %v1270 = vpop.permute.xlu0 %1269
    %v1272 = vmul.f32 %v1234, %v1255
    %v1273 = vmul.f32 %v1237, %v1260
    %v1274 = vmul.f32 %v1242, %v1265
    %v1275 = vmul.f32 %v1245, %v1270
    %v1276 = vld [vmem:[%s8] sm:$0xff]
    %v1277 = vld [vmem:[%s8 + $0x8] sm:$0xff]
    %v1278 = vld [vmem:[%s8 + $0x10] sm:$0xff]
    %v1279 = vld [vmem:[%s8 + $0x18] sm:$0xff]
    %1281 = vset.pattern.permute.xlu0 0
    %1282 = vperm.xlu0 %1281, %v1276
    %v1283 = vpop.permute.xlu0 %1282
    %1286 = vset.pattern.permute.xlu0 0
    %1287 = vperm.xlu0 %1286, %v1277
    %v1288 = vpop.permute.xlu0 %1287
    %1291 = vset.pattern.permute.xlu0 0
    %1292 = vperm.xlu0 %1291, %v1278
    %v1293 = vpop.permute.xlu0 %1292
    %1296 = vset.pattern.permute.xlu0 0
    %1297 = vperm.xlu0 %1296, %v1279
    %v1298 = vpop.permute.xlu0 %1297
    %v1300 = vadd.f32 %v1272, %v1283
    %v1301 = vadd.f32 %v1273, %v1288
    %v1302 = vadd.f32 %v1274, %v1293
    %v1303 = vadd.f32 %v1275, %v1298
    %v1304 = vmax.f32 %v1300, 0.0
    %v1305 = vmax.f32 %v1301, 0.0
    %v1306 = vmax.f32 %v1302, 0.0
    %v1307 = vmax.f32 %v1303, 0.0
    %v1308 = vld [vmem:[%s9] sm:$0xf]
    %v1309 = vld [vmem:[%s9 + $0x4] sm:$0xf]
    %v1310 = vld [vmem:[%s9 + $0x8] sm:$0xf]
    %v1311 = vld [vmem:[%s9 + $0xc] sm:$0xf]
    %v1312 = vld [vmem:[%s9 + $0x10] sm:$0xf]
    %v1313 = vld [vmem:[%s9 + $0x14] sm:$0xf]
    %v1314 = vld [vmem:[%s9 + $0x18] sm:$0xf]
    %v1315 = vld [vmem:[%s9 + $0x1c] sm:$0xf]
    %v1316 = vpack.c.bf16 %v1305, %v1304
    %v1317 = vpack.c.bf16 %v1307, %v1306
    %v1326 = vunpack.c.l.b16 %v1308
    %v1327 = vunpack.c.l.b16 %v1309
    %v1328 = vunpack.c.l.b16 %v1310
    %v1329 = vunpack.c.l.b16 %v1311
    %v1330 = vunpack.c.l.b16 %v1312
    %v1331 = vunpack.c.l.b16 %v1313
    %v1332 = vunpack.c.l.b16 %v1314
    %v1333 = vunpack.c.l.b16 %v1315
    %v1334 = vpack.c.b16 %v1327, %v1326
    %v1335 = vpack.c.b16 %v1329, %v1328
    %v1336 = vpack.c.b16 %v1331, %v1330
    %v1337 = vpack.c.b16 %v1333, %v1332
    %vm1338 = vcmask 261120
    %v1340 = vsel %vm1338, %v1334, 0
    %v1343 = vsel %vm1338, %v1335, 0
    %v1346 = vsel %vm1338, %v1336, 0
    %v1349 = vsel %vm1338, %v1337, 0
    %1351 = vmatprep.subr.bf16.mxu0 0
    %1352 = vmatpush1.bf16.msra.mxu0 %v1316
    %1353 = vmatprep.subr.bf16.mxu0 0
    %1354 = vmatpush1.bf16.msra.mxu0 %v1317
    %1355 = vmatprep.subr.bf16.mxu0 0
    %1356 = vmatpush1.bf16.msra.mxu0 0
    %1357 = vmatprep.subr.bf16.mxu0 0
    %1358 = vmatpush1.bf16.msra.mxu0 0
    %1359 = vmatprep.subr.bf16.mxu0 0
    %1360 = vmatpush1.bf16.msra.mxu0 0
    %1361 = vmatprep.subr.bf16.mxu0 0
    %1362 = vmatpush1.bf16.msra.mxu0 0
    %1363 = vmatprep.subr.bf16.mxu0 0
    %1364 = vmatpush1.bf16.msra.mxu0 0
    %1365 = vmatprep.subr.bf16.mxu0 0
    %1366 = vmatpush1.bf16.msra.mxu0 0
    %1367 = vmatprep.subr.bf16.mxu0 0
    %1368 = vmatpush1.bf16.msra.mxu0 0
    %1369 = vmatprep.subr.bf16.mxu0 0
    %1370 = vmatpush1.bf16.msra.mxu0 0
    %1371 = vmatprep.subr.bf16.mxu0 0
    %1372 = vmatpush1.bf16.msra.mxu0 0
    %1373 = vmatprep.subr.bf16.mxu0 0
    %1374 = vmatpush1.bf16.msra.mxu0 0
    %1375 = vmatprep.subr.bf16.mxu0 0
    %1376 = vmatpush1.bf16.msra.mxu0 0
    %1377 = vmatprep.subr.bf16.mxu0 0
    %1378 = vmatpush1.bf16.msra.mxu0 0
    %1379 = vmatprep.subr.bf16.mxu0 0
    %1380 = vmatpush1.bf16.msra.mxu0 0
    %1381 = vmatprep.subr.bf16.mxu0 0
    %1382 = vmatpush1.bf16.msra.mxu0 0
    %1383 = vmatprep.mubr.bf16.mxu0 0
    %1384 = vmatmul.mubr.bf16.gmra.mrb[0].mxu0 %v1340
    %v1385 = vpop.f32.mrb[0].mxu0
    %v1386 = vadd.f32 0.0, %v1385
    %v1387 = vpop.f32.mrb[0].mxu0
    %v1388 = vpop.f32.mrb[0].mxu0
    %v1389 = vadd.f32 0.0, %v1388
    %v1390 = vpop.f32.mrb[0].mxu0
    %1391 = vmatprep.mubr.bf16.mxu0 0
    %1392 = vmatmul.mubr.bf16.gmra.mrb[0].mxu0 %v1343
    %v1393 = vpop.f32.mrb[0].mxu0
    %v1394 = vadd.f32 0.0, %v1393
    %v1395 = vpop.f32.mrb[0].mxu0
    %v1396 = vpop.f32.mrb[0].mxu0
    %v1397 = vadd.f32 0.0, %v1396
    %v1398 = vpop.f32.mrb[0].mxu0
    %1399 = vmatprep.mubr.bf16.mxu0 0
    %1400 = vmatmul.mubr.bf16.gmra.mrb[0].mxu0 %v1346
    %v1401 = vpop.f32.mrb[0].mxu0
    %v1402 = vadd.f32 0.0, %v1401
    %v1403 = vpop.f32.mrb[0].mxu0
    %v1404 = vpop.f32.mrb[0].mxu0
    %v1405 = vadd.f32 0.0, %v1404
    %v1406 = vpop.f32.mrb[0].mxu0
    %1407 = vmatprep.mubr.bf16.mxu0 0
    %1408 = vmatmul.mubr.bf16.gmra.mrb[0].mxu0 %v1349
    %v1409 = vpop.f32.mrb[0].mxu0
    %v1410 = vadd.f32 0.0, %v1409
    %v1411 = vpop.f32.mrb[0].mxu0
    %v1412 = vpop.f32.mrb[0].mxu0
    %v1413 = vadd.f32 0.0, %v1412
    %v1414 = vpop.f32.mrb[0].mxu0
    %1415 = vdwg.mxu0
    %v1416 = vld [vmem:[%s10] sm:$0xff]
    %v1417 = vld [vmem:[%s10 + $0x8] sm:$0xff]
    %v1418 = vld [vmem:[%s10 + $0x10] sm:$0xff]
    %v1419 = vld [vmem:[%s10 + $0x18] sm:$0xff]
    %v1420 = vld [vmem:[%s10 + $0x20] sm:$0xff]
    %v1421 = vld [vmem:[%s10 + $0x28] sm:$0xff]
    %v1422 = vld [vmem:[%s10 + $0x30] sm:$0xff]
    %v1423 = vld [vmem:[%s10 + $0x38] sm:$0xff]
    %1425 = vset.pattern.permute.xlu0 0
    %1426 = vperm.xlu0 %1425, %v1416
    %v1427 = vpop.permute.xlu0 %1426
    %1430 = vset.pattern.permute.xlu0 0
    %1431 = vperm.xlu0 %1430, %v1417
    %v1432 = vpop.permute.xlu0 %1431
    %1435 = vset.pattern.permute.xlu0 0
    %1436 = vperm.xlu0 %1435, %v1418
    %v1437 = vpop.permute.xlu0 %1436
    %1440 = vset.pattern.permute.xlu0 0
    %1441 = vperm.xlu0 %1440, %v1419
    %v1442 = vpop.permute.xlu0 %1441
    %1445 = vset.pattern.permute.xlu0 0
    %1446 = vperm.xlu0 %1445, %v1420
    %v1447 = vpop.permute.xlu0 %1446
    %1450 = vset.pattern.permute.xlu0 0
    %1451 = vperm.xlu0 %1450, %v1421
    %v1452 = vpop.permute.xlu0 %1451
    %1455 = vset.pattern.permute.xlu0 0
    %1456 = vperm.xlu0 %1455, %v1422
    %v1457 = vpop.permute.xlu0 %1456
    %1460 = vset.pattern.permute.xlu0 0
    %1461 = vperm.xlu0 %1460, %v1423
    %v1462 = vpop.permute.xlu0 %1461
    %v1464 = vmul.f32 %v1386, %v1427
    %v1465 = vmul.f32 %v1389, %v1432
    %v1466 = vmul.f32 %v1394, %v1437
    %v1467 = vmul.f32 %v1397, %v1442
    %v1468 = vmul.f32 %v1402, %v1447
    %v1469 = vmul.f32 %v1405, %v1452
    %v1470 = vmul.f32 %v1410, %v1457
    %v1471 = vmul.f32 %v1413, %v1462
    %v1472 = vld [vmem:[%s11] sm:$0xff]
    %v1473 = vld [vmem:[%s11 + $0x8] sm:$0xff]
    %v1474 = vld [vmem:[%s11 + $0x10] sm:$0xff]
    %v1475 = vld [vmem:[%s11 + $0x18] sm:$0xff]
    %v1476 = vld [vmem:[%s11 + $0x20] sm:$0xff]
    %v1477 = vld [vmem:[%s11 + $0x28] sm:$0xff]
    %v1478 = vld [vmem:[%s11 + $0x30] sm:$0xff]
    %v1479 = vld [vmem:[%s11 + $0x38] sm:$0xff]
    %1481 = vset.pattern.permute.xlu0 0
    %1482 = vperm.xlu0 %1481, %v1472
    %v1483 = vpop.permute.xlu0 %1482
    %1486 = vset.pattern.permute.xlu0 0
    %1487 = vperm.xlu0 %1486, %v1473
    %v1488 = vpop.permute.xlu0 %1487
    %1491 = vset.pattern.permute.xlu0 0
    %1492 = vperm.xlu0 %1491, %v1474
    %v1493 = vpop.permute.xlu0 %1492
    %1496 = vset.pattern.permute.xlu0 0
    %1497 = vperm.xlu0 %1496, %v1475
    %v1498 = vpop.permute.xlu0 %1497
    %1501 = vset.pattern.permute.xlu0 0
    %1502 = vperm.xlu0 %1501, %v1476
    %v1503 = vpop.permute.xlu0 %1502
    %1506 = vset.pattern.permute.xlu0 0
    %1507 = vperm.xlu0 %1506, %v1477
    %v1508 = vpop.permute.xlu0 %1507
    %1511 = vset.pattern.permute.xlu0 0
    %1512 = vperm.xlu0 %1511, %v1478
    %v1513 = vpop.permute.xlu0 %1512
    %1516 = vset.pattern.permute.xlu0 0
    %1517 = vperm.xlu0 %1516, %v1479
    %v1518 = vpop.permute.xlu0 %1517
    %v1520 = vadd.f32 %v1464, %v1483
    %v1521 = vadd.f32 %v1465, %v1488
    %v1522 = vadd.f32 %v1466, %v1493
    %v1523 = vadd.f32 %v1467, %v1498
    %v1524 = vadd.f32 %v1468, %v1503
    %v1525 = vadd.f32 %v1469, %v1508
    %v1526 = vadd.f32 %v1470, %v1513
    %v1527 = vadd.f32 %v1471, %v1518
    %v1528 = vmax.f32 %v1520, 0.0
    %v1529 = vmax.f32 %v1521, 0.0
    %v1530 = vmax.f32 %v1522, 0.0
    %v1531 = vmax.f32 %v1523, 0.0
    %v1532 = vmax.f32 %v1524, 0.0
    %v1533 = vmax.f32 %v1525, 0.0
    %v1534 = vmax.f32 %v1526, 0.0
    %v1535 = vmax.f32 %v1527, 0.0
    %v1536 = vpack.c.bf16 %v1529, %v1528
    %v1537 = vpack.c.bf16 %v1531, %v1530
    %v1538 = vpack.c.bf16 %v1533, %v1532
    %v1539 = vpack.c.bf16 %v1535, %v1534
    %v1540 = vld [vmem:[%s12] sm:$0xf]
    %v1541 = vld [vmem:[%s12 + $0x4] sm:$0xf]
    %v1542 = vld [vmem:[%s12 + $0x8] sm:$0xf]
    %v1543 = vld [vmem:[%s12 + $0xc] sm:$0xf]
    %v1544 = vld [vmem:[%s12 + $0x10] sm:$0xf]
    %v1545 = vld [vmem:[%s12 + $0x14] sm:$0xf]
    %v1546 = vld [vmem:[%s12 + $0x18] sm:$0xf]
    %v1547 = vld [vmem:[%s12 + $0x1c] sm:$0xf]
    %v1556 = vunpack.c.l.b16 %v1540
    %v1557 = vunpack.c.l.b16 %v1541
    %v1558 = vunpack.c.l.b16 %v1542
    %v1559 = vunpack.c.l.b16 %v1543
    %v1560 = vunpack.c.l.b16 %v1544
    %v1561 = vunpack.c.l.b16 %v1545
    %v1562 = vunpack.c.l.b16 %v1546
    %v1563 = vunpack.c.l.b16 %v1547
    %v1564 = vpack.c.b16 %v1557, %v1556
    %v1565 = vpack.c.b16 %v1559, %v1558
    %v1566 = vpack.c.b16 %v1561, %v1560
    %v1567 = vpack.c.b16 %v1563, %v1562
    %v1573 = vsel %vm780, %v1536, 0
    %v1576 = vsel %vm780, %v1537, 0
    %v1579 = vsel %vm780, %v1538, 0
    %v1582 = vsel %vm780, %v1539, 0
    %1584 = vmatprep.subr.bf16.mxu0 0
    %1585 = vmatpush1.bf16.msra.mxu0 %v1564
    %1586 = vmatprep.subr.bf16.mxu0 0
    %1587 = vmatpush1.bf16.msra.mxu0 %v1565
    %1588 = vmatprep.subr.bf16.mxu0 0
    %1589 = vmatpush1.bf16.msra.mxu0 %v1566
    %1590 = vmatprep.subr.bf16.mxu0 0
    %1591 = vmatpush1.bf16.msra.mxu0 %v1567
    %1592 = vmatprep.subr.bf16.mxu0 0
    %1593 = vmatpush1.bf16.msra.mxu0 0
    %1594 = vmatprep.subr.bf16.mxu0 0
    %1595 = vmatpush1.bf16.msra.mxu0 0
    %1596 = vmatprep.subr.bf16.mxu0 0
    %1597 = vmatpush1.bf16.msra.mxu0 0
    %1598 = vmatprep.subr.bf16.mxu0 0
    %1599 = vmatpush1.bf16.msra.mxu0 0
    %1600 = vmatprep.subr.bf16.mxu0 0
    %1601 = vmatpush1.bf16.msra.mxu0 0
    %1602 = vmatprep.subr.bf16.mxu0 0
    %1603 = vmatpush1.bf16.msra.mxu0 0
    %1604 = vmatprep.subr.bf16.mxu0 0
    %1605 = vmatpush1.bf16.msra.mxu0 0
    %1606 = vmatprep.subr.bf16.mxu0 0
    %1607 = vmatpush1.bf16.msra.mxu0 0
    %1608 = vmatprep.subr.bf16.mxu0 0
    %1609 = vmatpush1.bf16.msra.mxu0 0
    %1610 = vmatprep.subr.bf16.mxu0 0
    %1611 = vmatpush1.bf16.msra.mxu0 0
    %1612 = vmatprep.subr.bf16.mxu0 0
    %1613 = vmatpush1.bf16.msra.mxu0 0
    %1614 = vmatprep.subr.bf16.mxu0 0
    %1615 = vmatpush1.bf16.msra.mxu0 0
    %1616 = vmatprep.mubr.bf16.mxu0 0
    %1617 = vmatmul.mubr.bf16.gmra.mrb[0].mxu0 %v1573
    %v1618 = vpop.f32.mrb[0].mxu0
    %v1619 = vadd.f32 0.0, %v1618
    %v1620 = vpop.f32.mrb[0].mxu0
    %v1621 = vpop.f32.mrb[0].mxu0
    %v1622 = vadd.f32 0.0, %v1621
    %v1623 = vpop.f32.mrb[0].mxu0
    %1624 = vmatprep.mubr.bf16.mxu0 0
    %1625 = vmatmul.mubr.bf16.gmra.mrb[0].mxu0 %v1576
    %v1626 = vpop.f32.mrb[0].mxu0
    %v1627 = vadd.f32 0.0, %v1626
    %v1628 = vpop.f32.mrb[0].mxu0
    %v1629 = vpop.f32.mrb[0].mxu0
    %v1630 = vadd.f32 0.0, %v1629
    %v1631 = vpop.f32.mrb[0].mxu0
    %1632 = vmatprep.mubr.bf16.mxu0 0
    %1633 = vmatmul.mubr.bf16.gmra.mrb[0].mxu0 %v1579
    %v1634 = vpop.f32.mrb[0].mxu0
    %v1635 = vadd.f32 0.0, %v1634
    %v1636 = vpop.f32.mrb[0].mxu0
    %v1637 = vpop.f32.mrb[0].mxu0
    %v1638 = vadd.f32 0.0, %v1637
    %v1639 = vpop.f32.mrb[0].mxu0
    %1640 = vmatprep.mubr.bf16.mxu0 0
    %1641 = vmatmul.mubr.bf16.gmra.mrb[0].mxu0 %v1582
    %v1642 = vpop.f32.mrb[0].mxu0
    %v1643 = vadd.f32 0.0, %v1642
    %v1644 = vpop.f32.mrb[0].mxu0
    %v1645 = vpop.f32.mrb[0].mxu0
    %v1646 = vadd.f32 0.0, %v1645
    %v1647 = vpop.f32.mrb[0].mxu0
    %1648 = vdwg.mxu0
    %1657 = vrot.lane.b32.xlu0 %v1619, 112
    %v1658 = vpop.permute.xlu0 %1657
    %1659 = vrot.lane.b32.xlu0 %v1622, 112
    %v1660 = vpop.permute.xlu0 %1659
    %1661 = vrot.lane.b32.xlu0 %v1627, 112
    %v1662 = vpop.permute.xlu0 %1661
    %1663 = vrot.lane.b32.xlu0 %v1630, 112
    %v1664 = vpop.permute.xlu0 %1663
    %1665 = vrot.lane.b32.xlu0 %v1635, 112
    %v1666 = vpop.permute.xlu0 %1665
    %1667 = vrot.lane.b32.xlu0 %v1638, 112
    %v1668 = vpop.permute.xlu0 %1667
    %1669 = vrot.lane.b32.xlu0 %v1643, 112
    %v1670 = vpop.permute.xlu0 %1669
    %1671 = vrot.lane.b32.xlu0 %v1646, 112
    %v1672 = vpop.permute.xlu0 %1671
    %v1681 = vmax.f32 %v1619, %v1658
    %v1682 = vmax.f32 %v1622, %v1660
    %v1683 = vmax.f32 %v1627, %v1662
    %v1684 = vmax.f32 %v1630, %v1664
    %v1685 = vmax.f32 %v1635, %v1666
    %v1686 = vmax.f32 %v1638, %v1668
    %v1687 = vmax.f32 %v1643, %v1670
    %v1688 = vmax.f32 %v1646, %v1672
    %1697 = vrot.lane.b32.xlu0 %v1681, 96
    %v1698 = vpop.permute.xlu0 %1697
    %1699 = vrot.lane.b32.xlu0 %v1682, 96
    %v1700 = vpop.permute.xlu0 %1699
    %1701 = vrot.lane.b32.xlu0 %v1683, 96
    %v1702 = vpop.permute.xlu0 %1701
    %1703 = vrot.lane.b32.xlu0 %v1684, 96
    %v1704 = vpop.permute.xlu0 %1703
    %1705 = vrot.lane.b32.xlu0 %v1685, 96
    %v1706 = vpop.permute.xlu0 %1705
    %1707 = vrot.lane.b32.xlu0 %v1686, 96
    %v1708 = vpop.permute.xlu0 %1707
    %1709 = vrot.lane.b32.xlu0 %v1687, 96
    %v1710 = vpop.permute.xlu0 %1709
    %1711 = vrot.lane.b32.xlu0 %v1688, 96
    %v1712 = vpop.permute.xlu0 %1711
    %v1721 = vmax.f32 %v1681, %v1698
    %v1722 = vmax.f32 %v1682, %v1700
    %v1723 = vmax.f32 %v1683, %v1702
    %v1724 = vmax.f32 %v1684, %v1704
    %v1725 = vmax.f32 %v1685, %v1706
    %v1726 = vmax.f32 %v1686, %v1708
    %v1727 = vmax.f32 %v1687, %v1710
    %v1728 = vmax.f32 %v1688, %v1712
    %v1729 = vpack.c.bf16 %v1722, %v1721
    %v1730 = vpack.c.bf16 %v1724, %v1723
    %v1731 = vpack.c.bf16 %v1726, %v1725
    %v1732 = vpack.c.bf16 %v1728, %v1727
    %1737 = vrot.lane.b32.xlu0 %v1729, 16
    %v1738 = vpop.permute.xlu0 %1737
    %1739 = vrot.lane.b32.xlu0 %v1730, 16
    %v1740 = vpop.permute.xlu0 %1739
    %1741 = vrot.lane.b32.xlu0 %v1731, 16
    %v1742 = vpop.permute.xlu0 %1741
    %1743 = vrot.lane.b32.xlu0 %v1732, 16
    %v1744 = vpop.permute.xlu0 %1743
    %1745 = vrot.lane.b32.xlu0 %v1729, 32
    %v1746 = vpop.permute.xlu0 %1745
    %1747 = vrot.lane.b32.xlu0 %v1730, 32
    %v1748 = vpop.permute.xlu0 %1747
    %1749 = vrot.lane.b32.xlu0 %v1731, 32
    %v1750 = vpop.permute.xlu0 %1749
    %1751 = vrot.lane.b32.xlu0 %v1732, 32
    %v1752 = vpop.permute.xlu0 %1751
    %1753 = vrot.lane.b32.xlu0 %v1729, 48
    %v1754 = vpop.permute.xlu0 %1753
    %1755 = vrot.lane.b32.xlu0 %v1730, 48
    %v1756 = vpop.permute.xlu0 %1755
    %1757 = vrot.lane.b32.xlu0 %v1731, 48
    %v1758 = vpop.permute.xlu0 %1757
    %1759 = vrot.lane.b32.xlu0 %v1732, 48
    %v1760 = vpop.permute.xlu0 %1759
    %1761 = vrot.lane.b32.xlu0 %v1729, 64
    %v1762 = vpop.permute.xlu0 %1761
    %1763 = vrot.lane.b32.xlu0 %v1730, 64
    %v1764 = vpop.permute.xlu0 %1763
    %1765 = vrot.lane.b32.xlu0 %v1731, 64
    %v1766 = vpop.permute.xlu0 %1765
    %1767 = vrot.lane.b32.xlu0 %v1732, 64
    %v1768 = vpop.permute.xlu0 %1767
    %1769 = vrot.lane.b32.xlu0 %v1729, 80
    %v1770 = vpop.permute.xlu0 %1769
    %1771 = vrot.lane.b32.xlu0 %v1730, 80
    %v1772 = vpop.permute.xlu0 %1771
    %1773 = vrot.lane.b32.xlu0 %v1731, 80
    %v1774 = vpop.permute.xlu0 %1773
    %1775 = vrot.lane.b32.xlu0 %v1732, 80
    %v1776 = vpop.permute.xlu0 %1775
    %1777 = vrot.lane.b32.xlu0 %v1729, 96
    %v1778 = vpop.permute.xlu0 %1777
    %1779 = vrot.lane.b32.xlu0 %v1730, 96
    %v1780 = vpop.permute.xlu0 %1779
    %1781 = vrot.lane.b32.xlu0 %v1731, 96
    %v1782 = vpop.permute.xlu0 %1781
    %1783 = vrot.lane.b32.xlu0 %v1732, 96
    %v1784 = vpop.permute.xlu0 %1783
    %1785 = vrot.lane.b32.xlu0 %v1729, 112
    %v1786 = vpop.permute.xlu0 %1785
    %1787 = vrot.lane.b32.xlu0 %v1730, 112
    %v1788 = vpop.permute.xlu0 %1787
    %1789 = vrot.lane.b32.xlu0 %v1731, 112
    %v1790 = vpop.permute.xlu0 %1789
    %1791 = vrot.lane.b32.xlu0 %v1732, 112
    %v1792 = vpop.permute.xlu0 %1791
    %vm1793 = vcmask 130048
    %v1796 = vsel %vm1793, %v1729, %v1738
    %v1799 = vsel %vm1793, %v1730, %v1740
    %v1802 = vsel %vm1793, %v1731, %v1742
    %v1805 = vsel %vm1793, %v1732, %v1744
    %v1807 = vsel %vm1338, %v1796, %v1746
    %v1809 = vsel %vm1338, %v1799, %v1748
    %v1811 = vsel %vm1338, %v1802, %v1750
    %v1813 = vsel %vm1338, %v1805, %v1752
    %vm1814 = vcmask 392192
    %v1816 = vsel %vm1814, %v1807, %v1754
    %v1818 = vsel %vm1814, %v1809, %v1756
    %v1820 = vsel %vm1814, %v1811, %v1758
    %v1822 = vsel %vm1814, %v1813, %v1760
    %v1824 = vsel %vm780, %v1816, %v1762
    %v1826 = vsel %vm780, %v1818, %v1764
    %v1828 = vsel %vm780, %v1820, %v1766
    %v1830 = vsel %vm780, %v1822, %v1768
    %vm1831 = vcmask 654336
    %v1833 = vsel %vm1831, %v1824, %v1770
    %v1835 = vsel %vm1831, %v1826, %v1772
    %v1837 = vsel %vm1831, %v1828, %v1774
    %v1839 = vsel %vm1831, %v1830, %v1776
    %vm1840 = vcmask 785408
    %v1842 = vsel %vm1840, %v1833, %v1778
    %v1844 = vsel %vm1840, %v1835, %v1780
    %v1846 = vsel %vm1840, %v1837, %v1782
    %v1848 = vsel %vm1840, %v1839, %v1784
    %vm1849 = vcmask 916480
    %v1851 = vsel %vm1849, %v1842, %v1786
    %v1854 = vsel %vm1849, %v1844, %v1788
    %v1857 = vsel %vm1849, %v1846, %v1790
    %v1860 = vsel %vm1849, %v1848, %v1792
    %v1862 = vld [vmem:[%s13] sm:$0xff]
    %v1863 = vld [vmem:[%s13 + $0x8] sm:$0xff]
    %v1864 = vld [vmem:[%s13 + $0x10] sm:$0xff]
    %v1865 = vld [vmem:[%s13 + $0x18] sm:$0xff]
    %v1866 = vld [vmem:[%s13 + $0x20] sm:$0xff]
    %v1867 = vld [vmem:[%s13 + $0x28] sm:$0xff]
    %v1868 = vld [vmem:[%s13 + $0x30] sm:$0xff]
    %v1869 = vld [vmem:[%s13 + $0x38] sm:$0xff]
    %v1870 = vld [vmem:[%s13 + $0x40] sm:$0xff]
    %v1871 = vld [vmem:[%s13 + $0x48] sm:$0xff]
    %v1872 = vld [vmem:[%s13 + $0x50] sm:$0xff]
    %v1873 = vld [vmem:[%s13 + $0x58] sm:$0xff]
    %v1874 = vld [vmem:[%s13 + $0x60] sm:$0xff]
    %v1875 = vld [vmem:[%s13 + $0x68] sm:$0xff]
    %v1876 = vld [vmem:[%s13 + $0x70] sm:$0xff]
    %v1877 = vld [vmem:[%s13 + $0x78] sm:$0xff]
    %v1894 = vunpack.c.l.b16 %v1862
    %v1895 = vunpack.c.h.b16 %v1862
    %v1896 = vunpack.c.l.b16 %v1863
    %v1897 = vunpack.c.h.b16 %v1863
    %v1898 = vunpack.c.l.b16 %v1864
    %v1899 = vunpack.c.h.b16 %v1864
    %v1900 = vunpack.c.l.b16 %v1865
    %v1901 = vunpack.c.h.b16 %v1865
    %v1902 = vunpack.c.l.b16 %v1866
    %v1903 = vunpack.c.h.b16 %v1866
    %v1904 = vunpack.c.l.b16 %v1867
    %v1905 = vunpack.c.h.b16 %v1867
    %v1906 = vunpack.c.l.b16 %v1868
    %v1907 = vunpack.c.h.b16 %v1868
    %v1908 = vunpack.c.l.b16 %v1869
    %v1909 = vunpack.c.h.b16 %v1869
    %v1910 = vunpack.c.l.b16 %v1870
    %v1911 = vunpack.c.h.b16 %v1870
    %v1912 = vunpack.c.l.b16 %v1871
    %v1913 = vunpack.c.h.b16 %v1871
    %v1914 = vunpack.c.l.b16 %v1872
    %v1915 = vunpack.c.h.b16 %v1872
    %v1916 = vunpack.c.l.b16 %v1873
    %v1917 = vunpack.c.h.b16 %v1873
    %v1918 = vunpack.c.l.b16 %v1874
    %v1919 = vunpack.c.h.b16 %v1874
    %v1920 = vunpack.c.l.b16 %v1875
    %v1921 = vunpack.c.h.b16 %v1875
    %v1922 = vunpack.c.l.b16 %v1876
    %v1923 = vunpack.c.h.b16 %v1876
    %v1924 = vunpack.c.l.b16 %v1877
    %v1925 = vunpack.c.h.b16 %v1877
    %v1926 = vpack.c.b16 %v1898, %v1894
    %v1927 = vpack.c.b16 %v1899, %v1895
    %v1928 = vpack.c.b16 %v1900, %v1896
    %v1929 = vpack.c.b16 %v1901, %v1897
    %v1930 = vpack.c.b16 %v1906, %v1902
    %v1931 = vpack.c.b16 %v1907, %v1903
    %v1932 = vpack.c.b16 %v1908, %v1904
    %v1933 = vpack.c.b16 %v1909, %v1905
    %v1934 = vpack.c.b16 %v1914, %v1910
    %v1935 = vpack.c.b16 %v1915, %v1911
    %v1936 = vpack.c.b16 %v1916, %v1912
    %v1937 = vpack.c.b16 %v1917, %v1913
    %v1938 = vpack.c.b16 %v1922, %v1918
    %v1939 = vpack.c.b16 %v1923, %v1919
    %v1940 = vpack.c.b16 %v1924, %v1920
    %v1941 = vpack.c.b16 %v1925, %v1921
    %v1958 = vmul.bf16 %v1851, %v1926
    %v1959 = vmul.bf16 %v1851, %v1927
    %v1960 = vmul.bf16 %v1851, %v1928
    %v1961 = vmul.bf16 %v1851, %v1929
    %v1962 = vmul.bf16 %v1854, %v1930
    %v1963 = vmul.bf16 %v1854, %v1931
    %v1964 = vmul.bf16 %v1854, %v1932
    %v1965 = vmul.bf16 %v1854, %v1933
    %v1966 = vmul.bf16 %v1857, %v1934
    %v1967 = vmul.bf16 %v1857, %v1935
    %v1968 = vmul.bf16 %v1857, %v1936
    %v1969 = vmul.bf16 %v1857, %v1937
    %v1970 = vmul.bf16 %v1860, %v1938
    %v1971 = vmul.bf16 %v1860, %v1939
    %v1972 = vmul.bf16 %v1860, %v1940
    %v1973 = vmul.bf16 %v1860, %v1941
    %v1974 = vld [vmem:[%s14] sm:$0x1]
    %v1976 = vsel %vm780, %v1974, 0
    %1978 = vmatprep.subr.bf16.mxu0 %v1959
    %1979 = vmatpush1.bf16.msra.mxu0 %v1958
    %1980 = vmatprep.subr.bf16.mxu0 %v1963
    %1981 = vmatpush1.bf16.msra.mxu0 %v1962
    %1982 = vmatprep.subr.bf16.mxu0 %v1967
    %1983 = vmatpush1.bf16.msra.mxu0 %v1966
    %1984 = vmatprep.subr.bf16.mxu0 %v1971
    %1985 = vmatpush1.bf16.msra.mxu0 %v1970
    %1986 = vmatprep.subr.bf16.mxu0 0
    %1987 = vmatpush1.bf16.msra.mxu0 0
    %1988 = vmatprep.subr.bf16.mxu0 0
    %1989 = vmatpush1.bf16.msra.mxu0 0
    %1990 = vmatprep.subr.bf16.mxu0 0
    %1991 = vmatpush1.bf16.msra.mxu0 0
    %1992 = vmatprep.subr.bf16.mxu0 0
    %1993 = vmatpush1.bf16.msra.mxu0 0
    %1994 = vmatprep.subr.bf16.mxu0 0
    %1995 = vmatpush1.bf16.msra.mxu0 0
    %1996 = vmatprep.subr.bf16.mxu0 0
    %1997 = vmatpush1.bf16.msra.mxu0 0
    %1998 = vmatprep.subr.bf16.mxu0 0
    %1999 = vmatpush1.bf16.msra.mxu0 0
    %2000 = vmatprep.subr.bf16.mxu0 0
    %2001 = vmatpush1.bf16.msra.mxu0 0
    %2002 = vmatprep.subr.bf16.mxu0 0
    %2003 = vmatpush1.bf16.msra.mxu0 0
    %2004 = vmatprep.subr.bf16.mxu0 0
    %2005 = vmatpush1.bf16.msra.mxu0 0
    %2006 = vmatprep.subr.bf16.mxu0 0
    %2007 = vmatpush1.bf16.msra.mxu0 0
    %2008 = vmatprep.subr.bf16.mxu0 0
    %2009 = vmatpush1.bf16.msra.mxu0 0
    %2010 = vmatprep.mubr.bf16.mxu0 0
    %2011 = vmatmul.mubr.bf16.gmra.mrb[0].mxu0 %v1976
    %v2012 = vpop.f32.mrb[0].mxu0
    %v2013 = vadd.f32 0.0, %v2012
    %v2014 = vpop.f32.mrb[0].mxu0
    %v2015 = vadd.f32 0.0, %v2014
    %v2016 = vpop.f32.mrb[0].mxu0
    %v2017 = vpop.f32.mrb[0].mxu0
    %2018 = vdwg.mxu0
    %2019 = vmatprep.subr.bf16.mxu0 %v1961
    %2020 = vmatpush1.bf16.msra.mxu0 %v1960
    %2021 = vmatprep.subr.bf16.mxu0 %v1965
    %2022 = vmatpush1.bf16.msra.mxu0 %v1964
    %2023 = vmatprep.subr.bf16.mxu0 %v1969
    %2024 = vmatpush1.bf16.msra.mxu0 %v1968
    %2025 = vmatprep.subr.bf16.mxu0 %v1973
    %2026 = vmatpush1.bf16.msra.mxu0 %v1972
    %2027 = vmatprep.subr.bf16.mxu0 0
    %2028 = vmatpush1.bf16.msra.mxu0 0
    %2029 = vmatprep.subr.bf16.mxu0 0
    %2030 = vmatpush1.bf16.msra.mxu0 0
    %2031 = vmatprep.subr.bf16.mxu0 0
    %2032 = vmatpush1.bf16.msra.mxu0 0
    %2033 = vmatprep.subr.bf16.mxu0 0
    %2034 = vmatpush1.bf16.msra.mxu0 0
    %2035 = vmatprep.subr.bf16.mxu0 0
    %2036 = vmatpush1.bf16.msra.mxu0 0
    %2037 = vmatprep.subr.bf16.mxu0 0
    %2038 = vmatpush1.bf16.msra.mxu0 0
    %2039 = vmatprep.subr.bf16.mxu0 0
    %2040 = vmatpush1.bf16.msra.mxu0 0
    %2041 = vmatprep.subr.bf16.mxu0 0
    %2042 = vmatpush1.bf16.msra.mxu0 0
    %2043 = vmatprep.subr.bf16.mxu0 0
    %2044 = vmatpush1.bf16.msra.mxu0 0
    %2045 = vmatprep.subr.bf16.mxu0 0
    %2046 = vmatpush1.bf16.msra.mxu0 0
    %2047 = vmatprep.subr.bf16.mxu0 0
    %2048 = vmatpush1.bf16.msra.mxu0 0
    %2049 = vmatprep.subr.bf16.mxu0 0
    %2050 = vmatpush1.bf16.msra.mxu0 0
    %2051 = vmatprep.mubr.bf16.mxu0 0
    %2052 = vmatmul.mubr.bf16.gmra.mrb[0].mxu0 %v1976
    %v2053 = vpop.f32.mrb[0].mxu0
    %v2054 = vadd.f32 0.0, %v2053
    %v2055 = vpop.f32.mrb[0].mxu0
    %v2056 = vadd.f32 0.0, %v2055
    %v2057 = vpop.f32.mrb[0].mxu0
    %v2058 = vpop.f32.mrb[0].mxu0
    %2059 = vdwg.mxu0
    %v2060 = vpack.c.bf16 %v2013, %v2013
    %v2061 = vpack.c.bf16 %v2015, %v2015
    %v2062 = vpack.c.bf16 %v2054, %v2054
    %v2063 = vpack.c.bf16 %v2056, %v2056
    %v2064 = vld [vmem:[%s15] sm:$0xf]
    %v2065 = vld [vmem:[%s15 + $0x4] sm:$0xf]
    %v2066 = vld [vmem:[%s15 + $0x8] sm:$0xf]
    %v2067 = vld [vmem:[%s15 + $0xc] sm:$0xf]
    %v2068 = vld [vmem:[%s15 + $0x10] sm:$0xf]
    %v2069 = vld [vmem:[%s15 + $0x14] sm:$0xf]
    %v2070 = vld [vmem:[%s15 + $0x18] sm:$0xf]
    %v2071 = vld [vmem:[%s15 + $0x1c] sm:$0xf]
    %v2072 = vld [vmem:[%s15 + $0x20] sm:$0xf]
    %v2073 = vld [vmem:[%s15 + $0x24] sm:$0xf]
    %v2074 = vld [vmem:[%s15 + $0x28] sm:$0xf]
    %v2075 = vld [vmem:[%s15 + $0x2c] sm:$0xf]
    %v2076 = vld [vmem:[%s15 + $0x30] sm:$0xf]
    %v2077 = vld [vmem:[%s15 + $0x34] sm:$0xf]
    %v2078 = vld [vmem:[%s15 + $0x38] sm:$0xf]
    %v2079 = vld [vmem:[%s15 + $0x3c] sm:$0xf]
    %v2080 = vld [vmem:[%s15 + $0x40] sm:$0xf]
    %v2081 = vld [vmem:[%s15 + $0x44] sm:$0xf]
    %v2082 = vld [vmem:[%s15 + $0x48] sm:$0xf]
    %v2083 = vld [vmem:[%s15 + $0x4c] sm:$0xf]
    %v2084 = vld [vmem:[%s15 + $0x50] sm:$0xf]
    %v2085 = vld [vmem:[%s15 + $0x54] sm:$0xf]
    %v2086 = vld [vmem:[%s15 + $0x58] sm:$0xf]
    %v2087 = vld [vmem:[%s15 + $0x5c] sm:$0xf]
    %v2088 = vld [vmem:[%s15 + $0x60] sm:$0xf]
    %v2089 = vld [vmem:[%s15 + $0x64] sm:$0xf]
    %v2090 = vld [vmem:[%s15 + $0x68] sm:$0xf]
    %v2091 = vld [vmem:[%s15 + $0x6c] sm:$0xf]
    %v2092 = vld [vmem:[%s15 + $0x70] sm:$0xf]
    %v2093 = vld [vmem:[%s15 + $0x74] sm:$0xf]
    %v2094 = vld [vmem:[%s15 + $0x78] sm:$0xf]
    %v2095 = vld [vmem:[%s15 + $0x7c] sm:$0xf]
    %v2096 = vld [vmem:[%s15 + $0x80] sm:$0xf]
    %v2097 = vld [vmem:[%s15 + $0x84] sm:$0xf]
    %v2098 = vld [vmem:[%s15 + $0x88] sm:$0xf]
    %v2099 = vld [vmem:[%s15 + $0x8c] sm:$0xf]
    %v2100 = vld [vmem:[%s15 + $0x90] sm:$0xf]
    %v2101 = vld [vmem:[%s15 + $0x94] sm:$0xf]
    %v2102 = vld [vmem:[%s15 + $0x98] sm:$0xf]
    %v2103 = vld [vmem:[%s15 + $0x9c] sm:$0xf]
    %v2104 = vld [vmem:[%s15 + $0xa0] sm:$0xf]
    %v2105 = vld [vmem:[%s15 + $0xa4] sm:$0xf]
    %v2106 = vld [vmem:[%s15 + $0xa8] sm:$0xf]
    %v2107 = vld [vmem:[%s15 + $0xac] sm:$0xf]
    %v2108 = vld [vmem:[%s15 + $0xb0] sm:$0xf]
    %v2109 = vld [vmem:[%s15 + $0xb4] sm:$0xf]
    %v2110 = vld [vmem:[%s15 + $0xb8] sm:$0xf]
    %v2111 = vld [vmem:[%s15 + $0xbc] sm:$0xf]
    %v2112 = vld [vmem:[%s15 + $0xc0] sm:$0xf]
    %v2113 = vld [vmem:[%s15 + $0xc4] sm:$0xf]
    %v2114 = vld [vmem:[%s15 + $0xc8] sm:$0xf]
    %v2115 = vld [vmem:[%s15 + $0xcc] sm:$0xf]
    %v2116 = vld [vmem:[%s15 + $0xd0] sm:$0xf]
    %v2117 = vld [vmem:[%s15 + $0xd4] sm:$0xf]
    %v2118 = vld [vmem:[%s15 + $0xd8] sm:$0xf]
    %v2119 = vld [vmem:[%s15 + $0xdc] sm:$0xf]
    %v2120 = vld [vmem:[%s15 + $0xe0] sm:$0xf]
    %v2121 = vld [vmem:[%s15 + $0xe4] sm:$0xf]
    %v2122 = vld [vmem:[%s15 + $0xe8] sm:$0xf]
    %v2123 = vld [vmem:[%s15 + $0xec] sm:$0xf]
    %v2124 = vld [vmem:[%s15 + $0xf0] sm:$0xf]
    %v2125 = vld [vmem:[%s15 + $0xf4] sm:$0xf]
    %v2126 = vld [vmem:[%s15 + $0xf8] sm:$0xf]
    %v2127 = vld [vmem:[%s15 + $0xfc] sm:$0xf]
    %v2128 = vld [vmem:[%s16] sm:$0x1]
    %v2130 = vlaneseq
    %v2131 = vshrl.u32 %v2130, 7
    %v2132 = vsub.s32 0, %v2131
    %v2133 = vrot.slane %v2128, %v2132
    %v2199 = vunpack.c.l.b16 %v2064
    %v2200 = vunpack.c.l.b16 %v2065
    %v2201 = vunpack.c.l.b16 %v2066
    %v2202 = vunpack.c.l.b16 %v2067
    %v2203 = vunpack.c.l.b16 %v2068
    %v2204 = vunpack.c.l.b16 %v2069
    %v2205 = vunpack.c.l.b16 %v2070
    %v2206 = vunpack.c.l.b16 %v2071
    %v2207 = vunpack.c.l.b16 %v2072
    %v2208 = vunpack.c.l.b16 %v2073
    %v2209 = vunpack.c.l.b16 %v2074
    %v2210 = vunpack.c.l.b16 %v2075
    %v2211 = vunpack.c.l.b16 %v2076
    %v2212 = vunpack.c.l.b16 %v2077
    %v2213 = vunpack.c.l.b16 %v2078
    %v2214 = vunpack.c.l.b16 %v2079
    %v2215 = vunpack.c.l.b16 %v2080
    %v2216 = vunpack.c.l.b16 %v2081
    %v2217 = vunpack.c.l.b16 %v2082
    %v2218 = vunpack.c.l.b16 %v2083
    %v2219 = vunpack.c.l.b16 %v2084
    %v2220 = vunpack.c.l.b16 %v2085
    %v2221 = vunpack.c.l.b16 %v2086
    %v2222 = vunpack.c.l.b16 %v2087
    %v2223 = vunpack.c.l.b16 %v2088
    %v2224 = vunpack.c.l.b16 %v2089
    %v2225 = vunpack.c.l.b16 %v2090
    %v2226 = vunpack.c.l.b16 %v2091
    %v2227 = vunpack.c.l.b16 %v2092
    %v2228 = vunpack.c.l.b16 %v2093
    %v2229 = vunpack.c.l.b16 %v2094
    %v2230 = vunpack.c.l.b16 %v2095
    %v2231 = vunpack.c.l.b16 %v2096
    %v2232 = vunpack.c.l.b16 %v2097
    %v2233 = vunpack.c.l.b16 %v2098
    %v2234 = vunpack.c.l.b16 %v2099
    %v2235 = vunpack.c.l.b16 %v2100
    %v2236 = vunpack.c.l.b16 %v2101
    %v2237 = vunpack.c.l.b16 %v2102
    %v2238 = vunpack.c.l.b16 %v2103
    %v2239 = vunpack.c.l.b16 %v2104
    %v2240 = vunpack.c.l.b16 %v2105
    %v2241 = vunpack.c.l.b16 %v2106
    %v2242 = vunpack.c.l.b16 %v2107
    %v2243 = vunpack.c.l.b16 %v2108
    %v2244 = vunpack.c.l.b16 %v2109
    %v2245 = vunpack.c.l.b16 %v2110
    %v2246 = vunpack.c.l.b16 %v2111
    %v2247 = vunpack.c.l.b16 %v2112
    %v2248 = vunpack.c.l.b16 %v2113
    %v2249 = vunpack.c.l.b16 %v2114
    %v2250 = vunpack.c.l.b16 %v2115
    %v2251 = vunpack.c.l.b16 %v2116
    %v2252 = vunpack.c.l.b16 %v2117
    %v2253 = vunpack.c.l.b16 %v2118
    %v2254 = vunpack.c.l.b16 %v2119
    %v2255 = vunpack.c.l.b16 %v2120
    %v2256 = vunpack.c.l.b16 %v2121
    %v2257 = vunpack.c.l.b16 %v2122
    %v2258 = vunpack.c.l.b16 %v2123
    %v2259 = vunpack.c.l.b16 %v2124
    %v2260 = vunpack.c.l.b16 %v2125
    %v2261 = vunpack.c.l.b16 %v2126
    %v2262 = vunpack.c.l.b16 %v2127
    %v2263 = vpack.c.b16 %v2200, %v2199
    %v2264 = vpack.c.b16 %v2202, %v2201
    %v2265 = vpack.c.b16 %v2204, %v2203
    %v2266 = vpack.c.b16 %v2206, %v2205
    %v2267 = vpack.c.b16 %v2208, %v2207
    %v2268 = vpack.c.b16 %v2210, %v2209
    %v2269 = vpack.c.b16 %v2212, %v2211
    %v2270 = vpack.c.b16 %v2214, %v2213
    %v2271 = vpack.c.b16 %v2216, %v2215
    %v2272 = vpack.c.b16 %v2218, %v2217
    %v2273 = vpack.c.b16 %v2220, %v2219
    %v2274 = vpack.c.b16 %v2222, %v2221
    %v2275 = vpack.c.b16 %v2224, %v2223
    %v2276 = vpack.c.b16 %v2226, %v2225
    %v2277 = vpack.c.b16 %v2228, %v2227
    %v2278 = vpack.c.b16 %v2230, %v2229
    %v2279 = vpack.c.b16 %v2232, %v2231
    %v2280 = vpack.c.b16 %v2234, %v2233
    %v2281 = vpack.c.b16 %v2236, %v2235
    %v2282 = vpack.c.b16 %v2238, %v2237
    %v2283 = vpack.c.b16 %v2240, %v2239
    %v2284 = vpack.c.b16 %v2242, %v2241
    %v2285 = vpack.c.b16 %v2244, %v2243
    %v2286 = vpack.c.b16 %v2246, %v2245
    %v2287 = vpack.c.b16 %v2248, %v2247
    %v2288 = vpack.c.b16 %v2250, %v2249
    %v2289 = vpack.c.b16 %v2252, %v2251
    %v2290 = vpack.c.b16 %v2254, %v2253
    %v2291 = vpack.c.b16 %v2256, %v2255
    %v2292 = vpack.c.b16 %v2258, %v2257
    %v2293 = vpack.c.b16 %v2260, %v2259
    %v2294 = vpack.c.b16 %v2262, %v2261
    %2327 = vmatprep.subr.bf16.mxu0 0
    %2328 = vmatpush1.bf16.msra.mxu0 %v2263
    %2329 = vmatprep.subr.bf16.mxu0 0
    %2330 = vmatpush1.bf16.msra.mxu0 %v2264
    %2331 = vmatprep.subr.bf16.mxu0 0
    %2332 = vmatpush1.bf16.msra.mxu0 %v2265
    %2333 = vmatprep.subr.bf16.mxu0 0
    %2334 = vmatpush1.bf16.msra.mxu0 %v2266
    %2335 = vmatprep.subr.bf16.mxu0 0
    %2336 = vmatpush1.bf16.msra.mxu0 %v2267
    %2337 = vmatprep.subr.bf16.mxu0 0
    %2338 = vmatpush1.bf16.msra.mxu0 %v2268
    %2339 = vmatprep.subr.bf16.mxu0 0
    %2340 = vmatpush1.bf16.msra.mxu0 %v2269
    %2341 = vmatprep.subr.bf16.mxu0 0
    %2342 = vmatpush1.bf16.msra.mxu0 %v2270
    %2343 = vmatprep.subr.bf16.mxu0 0
    %2344 = vmatpush1.bf16.msra.mxu0 %v2271
    %2345 = vmatprep.subr.bf16.mxu0 0
    %2346 = vmatpush1.bf16.msra.mxu0 %v2272
    %2347 = vmatprep.subr.bf16.mxu0 0
    %2348 = vmatpush1.bf16.msra.mxu0 %v2273
    %2349 = vmatprep.subr.bf16.mxu0 0
    %2350 = vmatpush1.bf16.msra.mxu0 %v2274
    %2351 = vmatprep.subr.bf16.mxu0 0
    %2352 = vmatpush1.bf16.msra.mxu0 %v2275
    %2353 = vmatprep.subr.bf16.mxu0 0
    %2354 = vmatpush1.bf16.msra.mxu0 %v2276
    %2355 = vmatprep.subr.bf16.mxu0 0
    %2356 = vmatpush1.bf16.msra.mxu0 %v2277
    %2357 = vmatprep.subr.bf16.mxu0 0
    %2358 = vmatpush1.bf16.msra.mxu0 %v2278
    %2359 = vmatprep.mubr.bf16.mxu0 %v2061
    %2360 = vmatmul.mubr.bf16.gmra.mrb[0].mxu0 %v2060
    %v2361 = vpop.f32.mrb[0].mxu0
    %v2362 = vadd.f32 %v2133, %v2361
    %v2363 = vpop.f32.mrb[0].mxu0
    %v2364 = vpop.f32.mrb[0].mxu0
    %v2365 = vpop.f32.mrb[0].mxu0
    %2366 = vdwg.mxu0
    %2367 = vmatprep.subr.bf16.mxu0 0
    %2368 = vmatpush1.bf16.msra.mxu0 %v2279
    %2369 = vmatprep.subr.bf16.mxu0 0
    %2370 = vmatpush1.bf16.msra.mxu0 %v2280
    %2371 = vmatprep.subr.bf16.mxu0 0
    %2372 = vmatpush1.bf16.msra.mxu0 %v2281
    %2373 = vmatprep.subr.bf16.mxu0 0
    %2374 = vmatpush1.bf16.msra.mxu0 %v2282
    %2375 = vmatprep.subr.bf16.mxu0 0
    %2376 = vmatpush1.bf16.msra.mxu0 %v2283
    %2377 = vmatprep.subr.bf16.mxu0 0
    %2378 = vmatpush1.bf16.msra.mxu0 %v2284
    %2379 = vmatprep.subr.bf16.mxu0 0
    %2380 = vmatpush1.bf16.msra.mxu0 %v2285
    %2381 = vmatprep.subr.bf16.mxu0 0
    %2382 = vmatpush1.bf16.msra.mxu0 %v2286
    %2383 = vmatprep.subr.bf16.mxu0 0
    %2384 = vmatpush1.bf16.msra.mxu0 %v2287
    %2385 = vmatprep.subr.bf16.mxu0 0
    %2386 = vmatpush1.bf16.msra.mxu0 %v2288
    %2387 = vmatprep.subr.bf16.mxu0 0
    %2388 = vmatpush1.bf16.msra.mxu0 %v2289
    %2389 = vmatprep.subr.bf16.mxu0 0
    %2390 = vmatpush1.bf16.msra.mxu0 %v2290
    %2391 = vmatprep.subr.bf16.mxu0 0
    %2392 = vmatpush1.bf16.msra.mxu0 %v2291
    %2393 = vmatprep.subr.bf16.mxu0 0
    %2394 = vmatpush1.bf16.msra.mxu0 %v2292
    %2395 = vmatprep.subr.bf16.mxu0 0
    %2396 = vmatpush1.bf16.msra.mxu0 %v2293
    %2397 = vmatprep.subr.bf16.mxu0 0
    %2398 = vmatpush1.bf16.msra.mxu0 %v2294
    %2399 = vmatprep.mubr.bf16.mxu0 %v2063
    %2400 = vmatmul.mubr.bf16.gmra.mrb[0].mxu0 %v2062
    %v2401 = vpop.f32.mrb[0].mxu0
    %v2402 = vadd.f32 %v2362, %v2401
    %v2403 = vpop.f32.mrb[0].mxu0
    %v2404 = vpop.f32.mrb[0].mxu0
    %v2405 = vpop.f32.mrb[0].mxu0
    %2406 = vdwg.mxu0
    %v2407 = vmax.f32 %v2402, 0.0
    %v2408 = vpack.c.bf16 %v2407, %v2407
    %v2409 = vld [vmem:[%s17] sm:$0xf]
    %v2410 = vld [vmem:[%s17 + $0x4] sm:$0xf]
    %v2411 = vld [vmem:[%s17 + $0x8] sm:$0xf]
    %v2412 = vld [vmem:[%s17 + $0xc] sm:$0xf]
    %v2413 = vld [vmem:[%s17 + $0x10] sm:$0xf]
    %v2414 = vld [vmem:[%s17 + $0x14] sm:$0xf]
    %v2415 = vld [vmem:[%s17 + $0x18] sm:$0xf]
    %v2416 = vld [vmem:[%s17 + $0x1c] sm:$0xf]
    %v2417 = vld [vmem:[%s18] sm:$0x1]
    %v2419 = vlaneseq
    %v2420 = vshrl.u32 %v2419, 7
    %v2421 = vsub.s32 0, %v2420
    %v2422 = vrot.slane %v2417, %v2421
    %v2432 = vunpack.c.l.b16 %v2409
    %v2433 = vunpack.c.l.b16 %v2410
    %v2434 = vunpack.c.l.b16 %v2411
    %v2435 = vunpack.c.l.b16 %v2412
    %v2436 = vunpack.c.l.b16 %v2413
    %v2437 = vunpack.c.l.b16 %v2414
    %v2438 = vunpack.c.l.b16 %v2415
    %v2439 = vunpack.c.l.b16 %v2416
    %v2440 = vpack.c.b16 %v2433, %v2432
    %v2441 = vpack.c.b16 %v2435, %v2434
    %v2442 = vpack.c.b16 %v2437, %v2436
    %v2443 = vpack.c.b16 %v2439, %v2438
    %v2449 = vsel %vm780, %v2408, 0
    %2451 = vmatprep.subr.bf16.mxu0 0
    %2452 = vmatpush1.bf16.msra.mxu0 %v2440
    %2453 = vmatprep.subr.bf16.mxu0 0
    %2454 = vmatpush1.bf16.msra.mxu0 %v2441
    %2455 = vmatprep.subr.bf16.mxu0 0
    %2456 = vmatpush1.bf16.msra.mxu0 %v2442
    %2457 = vmatprep.subr.bf16.mxu0 0
    %2458 = vmatpush1.bf16.msra.mxu0 %v2443
    %2459 = vmatprep.subr.bf16.mxu0 0
    %2460 = vmatpush1.bf16.msra.mxu0 0
    %2461 = vmatprep.subr.bf16.mxu0 0
    %2462 = vmatpush1.bf16.msra.mxu0 0
    %2463 = vmatprep.subr.bf16.mxu0 0
    %2464 = vmatpush1.bf16.msra.mxu0 0
    %2465 = vmatprep.subr.bf16.mxu0 0
    %2466 = vmatpush1.bf16.msra.mxu0 0
    %2467 = vmatprep.subr.bf16.mxu0 0
    %2468 = vmatpush1.bf16.msra.mxu0 0
    %2469 = vmatprep.subr.bf16.mxu0 0
    %2470 = vmatpush1.bf16.msra.mxu0 0
    %2471 = vmatprep.subr.bf16.mxu0 0
    %2472 = vmatpush1.bf16.msra.mxu0 0
    %2473 = vmatprep.subr.bf16.mxu0 0
    %2474 = vmatpush1.bf16.msra.mxu0 0
    %2475 = vmatprep.subr.bf16.mxu0 0
    %2476 = vmatpush1.bf16.msra.mxu0 0
    %2477 = vmatprep.subr.bf16.mxu0 0
    %2478 = vmatpush1.bf16.msra.mxu0 0
    %2479 = vmatprep.subr.bf16.mxu0 0
    %2480 = vmatpush1.bf16.msra.mxu0 0
    %2481 = vmatprep.subr.bf16.mxu0 0
    %2482 = vmatpush1.bf16.msra.mxu0 0
    %2483 = vmatprep.mubr.bf16.mxu0 0
    %2484 = vmatmul.mubr.bf16.gmra.mrb[0].mxu0 %v2449
    %v2485 = vpop.f32.mrb[0].mxu0
    %v2486 = vadd.f32 %v2422, %v2485
    %v2487 = vpop.f32.mrb[0].mxu0
    %v2488 = vpop.f32.mrb[0].mxu0
    %v2489 = vpop.f32.mrb[0].mxu0
    %2490 = vdwg.mxu0
    %2491 = vst [vmem:[#allocation2] sm:$0x3] %v2486
    // Predicated region
    $region78: #{efficient_audio_classifier_forward.1} parent=1 // pred_check
      _
    $region79: #{efficient_audio_classifier_forward.1} parent=1 // pred_check_branch
      %2493 = sbr.rel (0) target = $region81
    $region80: #{efficient_audio_classifier_forward.1} parent=1 // pred_region
      %s2495 = ssub.s32 32, 32
      %2496 = vsyncadd [#allocation3], %s2495
      %s2498 = sshll.u32 [#allocation2], 4
      %s2499 = int_to_ptr.vmem [resolvable:$true] %s2498
      %2501 = dma.vmem_to_hbm [thread:$0]  %s2499, 32, %s19, [#allocation3]
    $region81: #{efficient_audio_classifier_forward.1} parent=1 // pred_fallthru
      _
    // Predicated region
    $region82: #{efficient_audio_classifier_forward.1} parent=1 // pred_check
      _
    $region83: #{efficient_audio_classifier_forward.1} parent=1 // pred_check_branch
      %2503 = sbr.rel (0) target = $region85
    $region84: #{efficient_audio_classifier_forward.1} parent=1 // pred_region
      %2504 = dma.done [#allocation3], 32
    $region85: #{efficient_audio_classifier_forward.1} parent=1 // pred_fallthru
      _
    %2505 = vsyncpa [#allocation3], 1

</llo_original>
